<compile_context>
chip_gen: v5e
topology: v5e:2x2
jax: 0.10.0
libtpu: 0.0.40
codegen_flags: <defaults>
</compile_context>

<pallas_src>
import jax
import jax.numpy as jnp
from jax.experimental import pallas as pl
from jax.experimental.pallas import tpu as pltpu

IN_FEATURES = 28 * 28      # 784 logical K (fed unpadded; Mosaic pads in VMEM)
HIDDEN = 500               # logical hidden width
OUT_FEATURES = 10          # logical logits

HIDDEN_PAD = 512           # 500 -> 4*128 (zero-padded N of fc1 / K of fc2)
OUT_PAD = 128              # 10  -> 128   (lane-dense output block)

MAX_TM = 512               # batch-tile upper bound (multiple of 8)


def mlp_kernel(x_ref, w1_ref, b1_ref, w2_ref, b2_ref, o_ref):
    # In-kernel f32 -> bf16 cast of the activation tile (avoids an extra HBM
    # round trip of the dominant input tensor).
    x = x_ref[...].astype(jnp.bfloat16)
    # fc1: (TM, 784)bf16 @ (784, 512)bf16 -> f32 acc; bias + ReLU in f32.
    h = jnp.dot(x, w1_ref[...], preferred_element_type=jnp.float32)
    h = jnp.maximum(h + b1_ref[...], 0.0)
    # fc2: (TM, 512)bf16 @ (512, 128)bf16 -> f32 acc; bias in f32; store bf16.
    out = jnp.dot(h.astype(jnp.bfloat16), w2_ref[...],
                  preferred_element_type=jnp.float32)
    o_ref[...] = (out + b2_ref[...]).astype(o_ref.dtype)


def prepare_params(w1, b1, w2, b2):
    """Zero-pad logical params to MXU-friendly shapes, weights in bf16.

    w1: (784, 500)  b1: (500,)  w2: (500, 10)  b2: (10,)   (all f32, (in,out))
    Zero padding keeps the math identical: padded hidden units are ReLU(0)=0
    and have zero fc2 rows; padded output lanes have zero weights/bias and are
    sliced off in the wrapper.  K (=784) is NOT padded in HBM.
    """
    w1p = jnp.zeros((IN_FEATURES, HIDDEN_PAD), jnp.bfloat16)
    w1p = w1p.at[:, :HIDDEN].set(w1.astype(jnp.bfloat16))
    b1p = jnp.zeros((1, HIDDEN_PAD), jnp.float32)
    b1p = b1p.at[:, :HIDDEN].set(b1.reshape(1, -1))
    w2p = jnp.zeros((HIDDEN_PAD, OUT_PAD), jnp.bfloat16)
    w2p = w2p.at[:HIDDEN, :OUT_FEATURES].set(w2.astype(jnp.bfloat16))
    b2p = jnp.zeros((1, OUT_PAD), jnp.float32)
    b2p = b2p.at[:, :OUT_FEATURES].set(b2.reshape(1, -1))
    return w1p, b1p, w2p, b2p


def _pick_tile(batch_rows):
    """Batch tile: multiple of 8, <= MAX_TM; large batches get >=2 grid steps
    so the 'parallel' axis can be sharded across v7x's two TensorCores."""
    b8 = max(8, pl.cdiv(batch_rows, 8) * 8)
    return b8 if b8 <= MAX_TM else MAX_TM


def net_forward(x, w1p, b1p, w2p, b2p):
    """x: (B, 1, 28, 28) f32 (or anything flattening to rows of 784).
    Returns f32 logits of shape (B, 10)."""
    x2d = x.reshape(-1, IN_FEATURES)                 # == x.view(-1, 28*28)
    B = x2d.shape[0]
    tm = _pick_tile(B)
    n_tiles = pl.cdiv(B, tm)
    b_pad = n_tiles * tm
    if b_pad != B:
        # Cheap row-only pad (no K pad, no dtype cast); no-op for aligned B.
        x2d = jnp.pad(x2d, ((0, b_pad - B), (0, 0)))

    flops = 2 * b_pad * (IN_FEATURES * HIDDEN_PAD + HIDDEN_PAD * OUT_PAD)
    bytes_accessed = (b_pad * IN_FEATURES * 4          # x read (f32)
                      + w1p.size * 2 + w2p.size * 2    # bf16 weights
                      + b1p.size * 4 + b2p.size * 4    # f32 biases
                      + b_pad * OUT_PAD * 2)           # bf16 output write

    out = pl.pallas_call(
        mlp_kernel,
        out_shape=jax.ShapeDtypeStruct((b_pad, OUT_PAD), jnp.bfloat16),
        grid=(n_tiles,),
        in_specs=[
            # x tile marches with the batch grid (double-buffered by Pallas).
            pl.BlockSpec((tm, IN_FEATURES), lambda i: (i, 0)),
            # Weights / biases: constant block index -> fetched once, resident.
            pl.BlockSpec((IN_FEATURES, HIDDEN_PAD), lambda i: (0, 0)),
            pl.BlockSpec((1, HIDDEN_PAD), lambda i: (0, 0)),
            pl.BlockSpec((HIDDEN_PAD, OUT_PAD), lambda i: (0, 0)),
            pl.BlockSpec((1, OUT_PAD), lambda i: (0, 0)),
        ],
        out_specs=pl.BlockSpec((tm, OUT_PAD), lambda i: (i, 0)),
        compiler_params=pltpu.CompilerParams(
            dimension_semantics=("parallel",)),
        cost_estimate=pl.CostEstimate(flops=flops, transcendentals=0,
                                      bytes_accessed=bytes_accessed),
    )(x2d, w1p, b1p, w2p, b2p)

    # Slice off padded rows / lanes; upcast logits to f32 for downstream use.
    return out[:B, :OUT_FEATURES].astype(jnp.float32)


def init_params(key):
    """PyTorch nn.Linear default init: U(-1/sqrt(fan_in), 1/sqrt(fan_in)).
    Stored as (in, out) so the kernel computes x @ W (== x @ W_pt.T)."""
    k1, k2, k3, k4 = jax.random.split(key, 4)
    bound1 = 1.0 / (IN_FEATURES ** 0.5)
    bound2 = 1.0 / (HIDDEN ** 0.5)
    w1 = jax.random.uniform(k1, (IN_FEATURES, HIDDEN), jnp.float32, -bound1, bound1)
    b1 = jax.random.uniform(k2, (HIDDEN,), jnp.float32, -bound1, bound1)
    w2 = jax.random.uniform(k3, (HIDDEN, OUT_FEATURES), jnp.float32, -bound2, bound2)
    b2 = jax.random.uniform(k4, (OUT_FEATURES,), jnp.float32, -bound2, bound2)
    return w1, b1, w2, b2


if __name__ == "__main__":
    key = jax.random.PRNGKey(0)
    kx, kp = jax.random.split(key)

    # Small MNIST-like batch, NCHW (as PyTorch would feed it).
    x = jax.random.normal(kx, (2, 1, 28, 28), jnp.float32)
    w1, b1, w2, b2 = init_params(kp)
    w1p, b1p, w2p, b2p = prepare_params(w1, b1, w2, b2)

    out = net_forward(x, w1p, b1p, w2p, b2p)
    out = jax.block_until_ready(out)
    assert out.shape == (2, OUT_FEATURES)

    # Strict check: pure-JAX reference using the SAME bf16-quantized weights /
    # bf16 activations, f32 accumulation, bf16-rounded logits (kernel math).
    x2d = x.reshape(-1, IN_FEATURES)
    x_bf = x2d.astype(jnp.bfloat16)
    h_ref = jnp.dot(x_bf, w1p[:, :HIDDEN],
                    preferred_element_type=jnp.float32) + b1p[0, :HIDDEN]
    h_ref = jnp.maximum(h_ref, 0.0)
    ref_bf = jnp.dot(h_ref.astype(jnp.bfloat16), w2p[:HIDDEN, :OUT_FEATURES],
                     preferred_element_type=jnp.float32) + b2p[0, :OUT_FEATURES]
    ref_bf = ref_bf.astype(jnp.bfloat16).astype(jnp.float32)
    assert jnp.allclose(out, ref_bf, atol=2e-2, rtol=2e-2)

    # Loose check against the full-f32 PyTorch-equivalent forward
    # (bounds the bf16 quantization error of the whole pipeline).
    ref_f32 = jnp.maximum(x2d @ w1 + b1, 0.0) @ w2 + b2
    assert jnp.allclose(out, ref_f32, atol=6e-2, rtol=6e-2)

    print("KERNEL_OK")
</pallas_src>

<mosaic_0001>
module attributes {stable_mosaic.version = 11 : i64} {
  func.func @mlp_kernel(%arg0: i32, %arg1: memref<8x784xf32, #tpu.memory_space<vmem>>, %arg2: memref<784x512xbf16, #tpu.memory_space<vmem>>, %arg3: memref<1x512xf32, #tpu.memory_space<vmem>>, %arg4: memref<512x128xbf16, #tpu.memory_space<vmem>>, %arg5: memref<1x128xf32, #tpu.memory_space<vmem>>, %arg6: memref<8x128xbf16, #tpu.memory_space<vmem>>) attributes {dimension_semantics = [#tpu.dimension_semantics<parallel>], iteration_bounds = array<i64: 1>, scalar_prefetch = 0 : i64, scratch_operands = 0 : i64, tpu.core_type = #tpu.core_type<tc>, window_params = [{transform_indices = @transform_0, window_bounds = array<i64: 8, 784>}, {pipeline_mode = #tpu.pipeline_mode<synchronous>, transform_indices = @transform_1, window_bounds = array<i64: 784, 512>}, {pipeline_mode = #tpu.pipeline_mode<synchronous>, transform_indices = @transform_2, window_bounds = array<i64: 1, 512>}, {pipeline_mode = #tpu.pipeline_mode<synchronous>, transform_indices = @transform_3, window_bounds = array<i64: 512, 128>}, {pipeline_mode = #tpu.pipeline_mode<synchronous>, transform_indices = @transform_4, window_bounds = array<i64: 1, 128>}, {transform_indices = @transform_5, window_bounds = array<i64: 8, 128>}]} {
    %c0 = arith.constant 0 : index
    %c0_0 = arith.constant 0 : index
    %0 = vector.load %arg1[%c0, %c0_0] : memref<8x784xf32, #tpu.memory_space<vmem>>, vector<8x784xf32>
    %1 = arith.truncf %0 : vector<8x784xf32> to vector<8x784xbf16>
    %c0_1 = arith.constant 0 : index
    %c0_2 = arith.constant 0 : index
    %2 = vector.load %arg2[%c0_1, %c0_2] : memref<784x512xbf16, #tpu.memory_space<vmem>>, vector<784x512xbf16>
    %cst = arith.constant dense<0.000000e+00> : vector<8x512xf32>
    %3 = tpu.matmul %1, %2, %cst {dimension_numbers = #tpu.dot_dimension_numbers<[1], [0], [0], [1], [0, 0, 1, 1], [], []>} : vector<8x784xbf16>, vector<784x512xbf16>, vector<8x512xf32> -> vector<8x512xf32>
    %c0_3 = arith.constant 0 : index
    %c0_4 = arith.constant 0 : index
    %4 = vector.load %arg3[%c0_3, %c0_4] : memref<1x512xf32, #tpu.memory_space<vmem>>, vector<1x512xf32>
    %5 = vector.broadcast %4 : vector<1x512xf32> to vector<8x512xf32>
    %6 = arith.addf %3, %5 : vector<8x512xf32>
    %cst_5 = arith.constant 0.000000e+00 : f32
    %7 = vector.broadcast %cst_5 : f32 to vector<8x512xf32>
    %8 = arith.maximumf %6, %7 : vector<8x512xf32>
    %9 = arith.truncf %8 : vector<8x512xf32> to vector<8x512xbf16>
    %c0_6 = arith.constant 0 : index
    %c0_7 = arith.constant 0 : index
    %10 = vector.load %arg4[%c0_6, %c0_7] : memref<512x128xbf16, #tpu.memory_space<vmem>>, vector<512x128xbf16>
    %cst_8 = arith.constant dense<0.000000e+00> : vector<8x128xf32>
    %11 = tpu.matmul %9, %10, %cst_8 {dimension_numbers = #tpu.dot_dimension_numbers<[1], [0], [0], [1], [0, 0, 1, 1], [], []>} : vector<8x512xbf16>, vector<512x128xbf16>, vector<8x128xf32> -> vector<8x128xf32>
    %c0_9 = arith.constant 0 : index
    %c0_10 = arith.constant 0 : index
    %12 = vector.load %arg5[%c0_9, %c0_10] : memref<1x128xf32, #tpu.memory_space<vmem>>, vector<1x128xf32>
    %13 = vector.broadcast %12 : vector<1x128xf32> to vector<8x128xf32>
    %14 = arith.addf %11, %13 : vector<8x128xf32>
    %15 = arith.truncf %14 : vector<8x128xf32> to vector<8x128xbf16>
    %c0_11 = arith.constant 0 : index
    %c0_12 = arith.constant 0 : index
    %16 = vector.load %arg6[%c0_11, %c0_12] : memref<8x128xbf16, #tpu.memory_space<vmem>>, vector<8x128xbf16>
    tpu.vector_store %arg6[%c0_11, %c0_12], %15 {strides = array<i32>} : memref<8x128xbf16, #tpu.memory_space<vmem>>, vector<8x128xbf16>,
    return
  }
  func.func @transform_0(%arg0: i32) -> (i32, i32) {
    %c0_i32 = arith.constant 0 : i32
    %c0_i32_0 = arith.constant 0 : i32
    return %arg0, %c0_i32 : i32, i32
  }
  func.func @transform_1(%arg0: i32) -> (i32, i32) {
    %c0_i32 = arith.constant 0 : i32
    %c0_i32_0 = arith.constant 0 : i32
    %c0_i32_1 = arith.constant 0 : i32
    return %c0_i32, %c0_i32_0 : i32, i32
  }
  func.func @transform_2(%arg0: i32) -> (i32, i32) {
    %c0_i32 = arith.constant 0 : i32
    %c0_i32_0 = arith.constant 0 : i32
    %c0_i32_1 = arith.constant 0 : i32
    return %c0_i32, %c0_i32_0 : i32, i32
  }
  func.func @transform_3(%arg0: i32) -> (i32, i32) {
    %c0_i32 = arith.constant 0 : i32
    %c0_i32_0 = arith.constant 0 : i32
    %c0_i32_1 = arith.constant 0 : i32
    return %c0_i32, %c0_i32_0 : i32, i32
  }
  func.func @transform_4(%arg0: i32) -> (i32, i32) {
    %c0_i32 = arith.constant 0 : i32
    %c0_i32_0 = arith.constant 0 : i32
    %c0_i32_1 = arith.constant 0 : i32
    return %c0_i32, %c0_i32_0 : i32, i32
  }
  func.func @transform_5(%arg0: i32) -> (i32, i32) {
    %c0_i32 = arith.constant 0 : i32
    %c0_i32_0 = arith.constant 0 : i32
    return %arg0, %c0_i32 : i32, i32
  }
}

</mosaic_0001>

<llo_original>
// kernel: tpu_custom_call.1
$region0: #{tpu_custom_call.1}
  #allocation0 [shape = 'u32[]', space=smem, size = 0x4, offset = 0x4, fixed_abs, tag = 'smem constant byte address 0x4 - core index']
  #allocation1 [shape = 'u32[72,128]{1,0:T(1,128)}', space=vmem, size = 0x9000, scoped, tag = 'internal scratch']
  %s0 = inlined_call_operand.hbm [shape: f32[8,784], index: 0, kind: input, shape index: {}]
  %s1 = inlined_call_operand.hbm [shape: bf16[784,512], index: 1, kind: input, shape index: {}]
  %s2 = inlined_call_operand.hbm [shape: f32[1,512], index: 2, kind: input, shape index: {}]
  %s3 = inlined_call_operand.hbm [shape: bf16[512,128], index: 3, kind: input, shape index: {}]
  %s4 = inlined_call_operand.vmem [shape: f32[1,128], index: 4, kind: input, shape index: {}]
  %s5 = inlined_call_operand.hbm [shape: bf16[8,128], index: 5, kind: output, shape index: {}]
  %s6 = sld [smem:[#allocation0]]
  $region46: #{tpu_custom_call.1} parent=0
    _
  %s8 = ssub.s32 1, %s6
  %s9 = scalar_select 0, %s8, %s6
  $region1: #{tpu_custom_call.1} parent=0
    #allocation2 [shape = 'u8[28672]{0}', space=vmem, size = 0x7000, scoped, tag = 'input window, operand 0, single buffered']
    #allocation3 [shape = 's32[1]{0}', space=sflag, size = 0x4, scoped, tag = 'scoped memory for tpu_custom_call.1']
    #allocation4 [shape = 's32[1]{0}', space=sflag, size = 0x4, scoped, tag = 'scoped memory for tpu_custom_call.1']
    #allocation5 [shape = 'u8[802816]{0}', space=vmem, size = 0xc4000, scoped, tag = 'input window, operand 1, single buffered']
    #allocation6 [shape = 's32[1]{0}', space=sflag, size = 0x4, scoped, tag = 'scoped memory for tpu_custom_call.1']
    #allocation7 [shape = 'u8[2048]{0}', space=vmem, size = 0x800, scoped, tag = 'input window, operand 2, single buffered']
    #allocation8 [shape = 'u8[131072]{0}', space=vmem, size = 0x20000, scoped, tag = 'input window, operand 3, single buffered']
    #allocation9 [shape = 's32[1]{0}', space=sflag, size = 0x4, scoped, tag = 'scoped memory for tpu_custom_call.1']
    #allocation10 [shape = 'u8[2048]{0}', space=vmem, size = 0x800, scoped, tag = 'output window, operand 0, single buffered']
    %10 = vsyncpa [#allocation3], 0
    %11 = vsyncpa [#allocation6], 0
    %12 = vsyncpa [#allocation9], 0
    %13 = vsyncpa [#allocation4], 0
    // Predicated region
    $region2: #{tpu_custom_call.1} parent=1 // pred_check
      _
    $region3: #{tpu_custom_call.1} parent=1 // pred_check_branch
      %15 = sbr.rel (0) target = $region5
    $region4: #{tpu_custom_call.1} parent=1 // pred_region
      %17 = vsyncadd [#allocation3], 0
      %s19 = sshll.u32 %s0, 4
      %s20 = int_to_ptr.hbm [resolvable:$true] %s19
      %s21 = sshll.u32 [#allocation2], 4
      %s22 = int_to_ptr.vmem [resolvable:$true] %s21
      %24 = dma.hbm_to_vmem [thread:$0]  %s20, 896, %s22, [#allocation3]
    $region5: #{tpu_custom_call.1} parent=1 // pred_fallthru
      _
    // Predicated region
    $region6: #{tpu_custom_call.1} parent=1 // pred_check
      _
    $region7: #{tpu_custom_call.1} parent=1 // pred_check_branch
      %26 = sbr.rel (0) target = $region9
    $region8: #{tpu_custom_call.1} parent=1 // pred_region
      %28 = vsyncadd [#allocation6], 0
      %s29 = sshll.u32 %s1, 4
      %s30 = int_to_ptr.hbm [resolvable:$true] %s29
      %s31 = sshll.u32 [#allocation5], 4
      %s32 = int_to_ptr.vmem [resolvable:$true] %s31
      %37 = dma.hbm_to_vmem [thread:$0]  %s30, 25088, %s32, [#allocation6], 256, 256, 16
    $region9: #{tpu_custom_call.1} parent=1 // pred_fallthru
      _
    // Predicated region
    $region10: #{tpu_custom_call.1} parent=1 // pred_check
      _
    $region11: #{tpu_custom_call.1} parent=1 // pred_check_branch
      %39 = sbr.rel (0) target = $region13
    $region12: #{tpu_custom_call.1} parent=1 // pred_region
      %41 = vsyncadd [#allocation6], 0
      %s43 = sshll.u32 %s2, 4
      %s44 = int_to_ptr.hbm [resolvable:$true] %s43
      %s45 = sshll.u32 [#allocation7], 4
      %s46 = int_to_ptr.vmem [resolvable:$true] %s45
      %48 = dma.hbm_to_vmem [thread:$0]  %s44, 64, %s46, [#allocation6]
    $region13: #{tpu_custom_call.1} parent=1 // pred_fallthru
      _
    // Predicated region
    $region14: #{tpu_custom_call.1} parent=1 // pred_check
      _
    $region15: #{tpu_custom_call.1} parent=1 // pred_check_branch
      %50 = sbr.rel (0) target = $region17
    $region16: #{tpu_custom_call.1} parent=1 // pred_region
      %52 = vsyncadd [#allocation9], 0
      %s53 = sshll.u32 %s3, 4
      %s54 = int_to_ptr.hbm [resolvable:$true] %s53
      %s55 = sshll.u32 [#allocation8], 4
      %s56 = int_to_ptr.vmem [resolvable:$true] %s55
      %61 = dma.hbm_to_vmem [thread:$0]  %s54, 4096, %s56, [#allocation9], 64, 64, 4
    $region17: #{tpu_custom_call.1} parent=1 // pred_fallthru
      _
    // Predicated region
    $region18: #{tpu_custom_call.1} parent=1 // pred_check
      _
    $region19: #{tpu_custom_call.1} parent=1 // pred_check_branch
      %63 = sbr.rel (0) target = $region21
    $region20: #{tpu_custom_call.1} parent=1 // pred_region
      _
    $region21: #{tpu_custom_call.1} parent=1 // pred_fallthru
      _
    // Predicated region
    $region22: #{tpu_custom_call.1} parent=1 // pred_check
      _
    $region23: #{tpu_custom_call.1} parent=1 // pred_check_branch
      %65 = sbr.rel (0) target = $region25
    $region24: #{tpu_custom_call.1} parent=1 // pred_region
      %67 = dma.done [#allocation3], 896
    $region25: #{tpu_custom_call.1} parent=1 // pred_fallthru
      _
    // Predicated region
    $region26: #{tpu_custom_call.1} parent=1 // pred_check
      _
    $region27: #{tpu_custom_call.1} parent=1 // pred_check_branch
      %69 = sbr.rel (0) target = $region29
    $region28: #{tpu_custom_call.1} parent=1 // pred_region
      %71 = dma.done [#allocation6], 25088
    $region29: #{tpu_custom_call.1} parent=1 // pred_fallthru
      _
    // Predicated region
    $region30: #{tpu_custom_call.1} parent=1 // pred_check
      _
    $region31: #{tpu_custom_call.1} parent=1 // pred_check_branch
      %73 = sbr.rel (0) target = $region33
    $region32: #{tpu_custom_call.1} parent=1 // pred_region
      %75 = dma.done [#allocation6], 64
    $region33: #{tpu_custom_call.1} parent=1 // pred_fallthru
      _
    // Predicated region
    $region34: #{tpu_custom_call.1} parent=1 // pred_check
      _
    $region35: #{tpu_custom_call.1} parent=1 // pred_check_branch
      %77 = sbr.rel (0) target = $region37
    $region36: #{tpu_custom_call.1} parent=1 // pred_region
      %79 = dma.done [#allocation9], 4096
    $region37: #{tpu_custom_call.1} parent=1 // pred_fallthru
      _
    %v81 = vld [vmem:[#allocation2] sm:$0xff]
    %v82 = vld [vmem:[#allocation2 + $0x8] sm:$0xff]
    %v83 = vld [vmem:[#allocation2 + $0x10] sm:$0xff]
    %v84 = vld [vmem:[#allocation2 + $0x18] sm:$0xff]
    %v85 = vld [vmem:[#allocation2 + $0x20] sm:$0xff]
    %v86 = vld [vmem:[#allocation2 + $0x28] sm:$0xff]
    %v87 = vld [vmem:[#allocation2 + $0x30] sm:$0xff]
    %v88 = vpack.c.bf16 %v81, %v81
    %v89 = vpack.c.bf16 %v82, %v82
    %v90 = vpack.c.bf16 %v83, %v83
    %v91 = vpack.c.bf16 %v84, %v84
    %v92 = vpack.c.bf16 %v85, %v85
    %v93 = vpack.c.bf16 %v86, %v86
    %v94 = vpack.c.bf16 %v87, %v87
    %v95 = vld [vmem:[#allocation5] sm:$0xff]
    %v96 = vld [vmem:[#allocation5 + $0x8] sm:$0xff]
    %v97 = vld [vmem:[#allocation5 + $0x10] sm:$0xff]
    %v98 = vld [vmem:[#allocation5 + $0x18] sm:$0xff]
    %v99 = vld [vmem:[#allocation5 + $0x20] sm:$0xff]
    %v100 = vld [vmem:[#allocation5 + $0x28] sm:$0xff]
    %v101 = vld [vmem:[#allocation5 + $0x30] sm:$0xff]
    %v102 = vld [vmem:[#allocation5 + $0x38] sm:$0xff]
    %v103 = vld [vmem:[#allocation5 + $0x40] sm:$0xff]
    %v104 = vld [vmem:[#allocation5 + $0x48] sm:$0xff]
    %v105 = vld [vmem:[#allocation5 + $0x50] sm:$0xff]
    %v106 = vld [vmem:[#allocation5 + $0x58] sm:$0xff]
    %v107 = vld [vmem:[#allocation5 + $0x60] sm:$0xff]
    %v108 = vld [vmem:[#allocation5 + $0x68] sm:$0xff]
    %v109 = vld [vmem:[#allocation5 + $0x70] sm:$0xff]
    %v110 = vld [vmem:[#allocation5 + $0x78] sm:$0xff]
    %v111 = vld [vmem:[#allocation5 + $0x80] sm:$0xff]
    %v112 = vld [vmem:[#allocation5 + $0x88] sm:$0xff]
    %v113 = vld [vmem:[#allocation5 + $0x90] sm:$0xff]
    %v114 = vld [vmem:[#allocation5 + $0x98] sm:$0xff]
    %v115 = vld [vmem:[#allocation5 + $0xa0] sm:$0xff]
    %v116 = vld [vmem:[#allocation5 + $0xa8] sm:$0xff]
    %v117 = vld [vmem:[#allocation5 + $0xb0] sm:$0xff]
    %v118 = vld [vmem:[#allocation5 + $0xb8] sm:$0xff]
    %v119 = vld [vmem:[#allocation5 + $0xc0] sm:$0xff]
    %v120 = vld [vmem:[#allocation5 + $0xc8] sm:$0xff]
    %v121 = vld [vmem:[#allocation5 + $0xd0] sm:$0xff]
    %v122 = vld [vmem:[#allocation5 + $0xd8] sm:$0xff]
    %v123 = vld [vmem:[#allocation5 + $0xe0] sm:$0xff]
    %v124 = vld [vmem:[#allocation5 + $0xe8] sm:$0xff]
    %v125 = vld [vmem:[#allocation5 + $0xf0] sm:$0xff]
    %v126 = vld [vmem:[#allocation5 + $0xf8] sm:$0xff]
    %v127 = vld [vmem:[#allocation5 + $0x100] sm:$0xff]
    %v128 = vld [vmem:[#allocation5 + $0x108] sm:$0xff]
    %v129 = vld [vmem:[#allocation5 + $0x110] sm:$0xff]
    %v130 = vld [vmem:[#allocation5 + $0x118] sm:$0xff]
    %v131 = vld [vmem:[#allocation5 + $0x120] sm:$0xff]
    %v132 = vld [vmem:[#allocation5 + $0x128] sm:$0xff]
    %v133 = vld [vmem:[#allocation5 + $0x130] sm:$0xff]
    %v134 = vld [vmem:[#allocation5 + $0x138] sm:$0xff]
    %v135 = vld [vmem:[#allocation5 + $0x140] sm:$0xff]
    %v136 = vld [vmem:[#allocation5 + $0x148] sm:$0xff]
    %v137 = vld [vmem:[#allocation5 + $0x150] sm:$0xff]
    %v138 = vld [vmem:[#allocation5 + $0x158] sm:$0xff]
    %v139 = vld [vmem:[#allocation5 + $0x160] sm:$0xff]
    %v140 = vld [vmem:[#allocation5 + $0x168] sm:$0xff]
    %v141 = vld [vmem:[#allocation5 + $0x170] sm:$0xff]
    %v142 = vld [vmem:[#allocation5 + $0x178] sm:$0xff]
    %v143 = vld [vmem:[#allocation5 + $0x180] sm:$0xff]
    %v144 = vld [vmem:[#allocation5 + $0x188] sm:$0xff]
    %v145 = vld [vmem:[#allocation5 + $0x190] sm:$0xff]
    %v146 = vld [vmem:[#allocation5 + $0x198] sm:$0xff]
    %v147 = vld [vmem:[#allocation5 + $0x1a0] sm:$0xff]
    %v148 = vld [vmem:[#allocation5 + $0x1a8] sm:$0xff]
    %v149 = vld [vmem:[#allocation5 + $0x1b0] sm:$0xff]
    %v150 = vld [vmem:[#allocation5 + $0x1b8] sm:$0xff]
    %v151 = vld [vmem:[#allocation5 + $0x1c0] sm:$0xff]
    %v152 = vld [vmem:[#allocation5 + $0x1c8] sm:$0xff]
    %v153 = vld [vmem:[#allocation5 + $0x1d0] sm:$0xff]
    %v154 = vld [vmem:[#allocation5 + $0x1d8] sm:$0xff]
    %v155 = vld [vmem:[#allocation5 + $0x1e0] sm:$0xff]
    %v156 = vld [vmem:[#allocation5 + $0x1e8] sm:$0xff]
    %v157 = vld [vmem:[#allocation5 + $0x1f0] sm:$0xff]
    %v158 = vld [vmem:[#allocation5 + $0x1f8] sm:$0xff]
    %v159 = vld [vmem:[#allocation5 + $0x200] sm:$0xff]
    %v160 = vld [vmem:[#allocation5 + $0x208] sm:$0xff]
    %v161 = vld [vmem:[#allocation5 + $0x210] sm:$0xff]
    %v162 = vld [vmem:[#allocation5 + $0x218] sm:$0xff]
    %v163 = vld [vmem:[#allocation5 + $0x220] sm:$0xff]
    %v164 = vld [vmem:[#allocation5 + $0x228] sm:$0xff]
    %v165 = vld [vmem:[#allocation5 + $0x230] sm:$0xff]
    %v166 = vld [vmem:[#allocation5 + $0x238] sm:$0xff]
    %v167 = vld [vmem:[#allocation5 + $0x240] sm:$0xff]
    %v168 = vld [vmem:[#allocation5 + $0x248] sm:$0xff]
    %v169 = vld [vmem:[#allocation5 + $0x250] sm:$0xff]
    %v170 = vld [vmem:[#allocation5 + $0x258] sm:$0xff]
    %v171 = vld [vmem:[#allocation5 + $0x260] sm:$0xff]
    %v172 = vld [vmem:[#allocation5 + $0x268] sm:$0xff]
    %v173 = vld [vmem:[#allocation5 + $0x270] sm:$0xff]
    %v174 = vld [vmem:[#allocation5 + $0x278] sm:$0xff]
    %v175 = vld [vmem:[#allocation5 + $0x280] sm:$0xff]
    %v176 = vld [vmem:[#allocation5 + $0x288] sm:$0xff]
    %v177 = vld [vmem:[#allocation5 + $0x290] sm:$0xff]
    %v178 = vld [vmem:[#allocation5 + $0x298] sm:$0xff]
    %v179 = vld [vmem:[#allocation5 + $0x2a0] sm:$0xff]
    %v180 = vld [vmem:[#allocation5 + $0x2a8] sm:$0xff]
    %v181 = vld [vmem:[#allocation5 + $0x2b0] sm:$0xff]
    %v182 = vld [vmem:[#allocation5 + $0x2b8] sm:$0xff]
    %v183 = vld [vmem:[#allocation5 + $0x2c0] sm:$0xff]
    %v184 = vld [vmem:[#allocation5 + $0x2c8] sm:$0xff]
    %v185 = vld [vmem:[#allocation5 + $0x2d0] sm:$0xff]
    %v186 = vld [vmem:[#allocation5 + $0x2d8] sm:$0xff]
    %v187 = vld [vmem:[#allocation5 + $0x2e0] sm:$0xff]
    %v188 = vld [vmem:[#allocation5 + $0x2e8] sm:$0xff]
    %v189 = vld [vmem:[#allocation5 + $0x2f0] sm:$0xff]
    %v190 = vld [vmem:[#allocation5 + $0x2f8] sm:$0xff]
    %v191 = vld [vmem:[#allocation5 + $0x300] sm:$0xff]
    %v192 = vld [vmem:[#allocation5 + $0x308] sm:$0xff]
    %v193 = vld [vmem:[#allocation5 + $0x310] sm:$0xff]
    %v194 = vld [vmem:[#allocation5 + $0x318] sm:$0xff]
    %v195 = vld [vmem:[#allocation5 + $0x320] sm:$0xff]
    %v196 = vld [vmem:[#allocation5 + $0x328] sm:$0xff]
    %v197 = vld [vmem:[#allocation5 + $0x330] sm:$0xff]
    %v198 = vld [vmem:[#allocation5 + $0x338] sm:$0xff]
    %v199 = vld [vmem:[#allocation5 + $0x340] sm:$0xff]
    %v200 = vld [vmem:[#allocation5 + $0x348] sm:$0xff]
    %v201 = vld [vmem:[#allocation5 + $0x350] sm:$0xff]
    %v202 = vld [vmem:[#allocation5 + $0x358] sm:$0xff]
    %v203 = vld [vmem:[#allocation5 + $0x360] sm:$0xff]
    %v204 = vld [vmem:[#allocation5 + $0x368] sm:$0xff]
    %v205 = vld [vmem:[#allocation5 + $0x370] sm:$0xff]
    %v206 = vld [vmem:[#allocation5 + $0x378] sm:$0xff]
    %v207 = vld [vmem:[#allocation5 + $0x380] sm:$0xff]
    %v208 = vld [vmem:[#allocation5 + $0x388] sm:$0xff]
    %v209 = vld [vmem:[#allocation5 + $0x390] sm:$0xff]
    %v210 = vld [vmem:[#allocation5 + $0x398] sm:$0xff]
    %v211 = vld [vmem:[#allocation5 + $0x3a0] sm:$0xff]
    %v212 = vld [vmem:[#allocation5 + $0x3a8] sm:$0xff]
    %v213 = vld [vmem:[#allocation5 + $0x3b0] sm:$0xff]
    %v214 = vld [vmem:[#allocation5 + $0x3b8] sm:$0xff]
    %v215 = vld [vmem:[#allocation5 + $0x3c0] sm:$0xff]
    %v216 = vld [vmem:[#allocation5 + $0x3c8] sm:$0xff]
    %v217 = vld [vmem:[#allocation5 + $0x3d0] sm:$0xff]
    %v218 = vld [vmem:[#allocation5 + $0x3d8] sm:$0xff]
    %v219 = vld [vmem:[#allocation5 + $0x3e0] sm:$0xff]
    %v220 = vld [vmem:[#allocation5 + $0x3e8] sm:$0xff]
    %v221 = vld [vmem:[#allocation5 + $0x3f0] sm:$0xff]
    %v222 = vld [vmem:[#allocation5 + $0x3f8] sm:$0xff]
    %v223 = vld [vmem:[#allocation5 + $0x400] sm:$0xff]
    %v224 = vld [vmem:[#allocation5 + $0x408] sm:$0xff]
    %v225 = vld [vmem:[#allocation5 + $0x410] sm:$0xff]
    %v226 = vld [vmem:[#allocation5 + $0x418] sm:$0xff]
    %v227 = vld [vmem:[#allocation5 + $0x420] sm:$0xff]
    %v228 = vld [vmem:[#allocation5 + $0x428] sm:$0xff]
    %v229 = vld [vmem:[#allocation5 + $0x430] sm:$0xff]
    %v230 = vld [vmem:[#allocation5 + $0x438] sm:$0xff]
    %v231 = vld [vmem:[#allocation5 + $0x440] sm:$0xff]
    %v232 = vld [vmem:[#allocation5 + $0x448] sm:$0xff]
    %v233 = vld [vmem:[#allocation5 + $0x450] sm:$0xff]
    %v234 = vld [vmem:[#allocation5 + $0x458] sm:$0xff]
    %v235 = vld [vmem:[#allocation5 + $0x460] sm:$0xff]
    %v236 = vld [vmem:[#allocation5 + $0x468] sm:$0xff]
    %v237 = vld [vmem:[#allocation5 + $0x470] sm:$0xff]
    %v238 = vld [vmem:[#allocation5 + $0x478] sm:$0xff]
    %v239 = vld [vmem:[#allocation5 + $0x480] sm:$0xff]
    %v240 = vld [vmem:[#allocation5 + $0x488] sm:$0xff]
    %v241 = vld [vmem:[#allocation5 + $0x490] sm:$0xff]
    %v242 = vld [vmem:[#allocation5 + $0x498] sm:$0xff]
    %v243 = vld [vmem:[#allocation5 + $0x4a0] sm:$0xff]
    %v244 = vld [vmem:[#allocation5 + $0x4a8] sm:$0xff]
    %v245 = vld [vmem:[#allocation5 + $0x4b0] sm:$0xff]
    %v246 = vld [vmem:[#allocation5 + $0x4b8] sm:$0xff]
    %v247 = vld [vmem:[#allocation5 + $0x4c0] sm:$0xff]
    %v248 = vld [vmem:[#allocation5 + $0x4c8] sm:$0xff]
    %v249 = vld [vmem:[#allocation5 + $0x4d0] sm:$0xff]
    %v250 = vld [vmem:[#allocation5 + $0x4d8] sm:$0xff]
    %v251 = vld [vmem:[#allocation5 + $0x4e0] sm:$0xff]
    %v252 = vld [vmem:[#allocation5 + $0x4e8] sm:$0xff]
    %v253 = vld [vmem:[#allocation5 + $0x4f0] sm:$0xff]
    %v254 = vld [vmem:[#allocation5 + $0x4f8] sm:$0xff]
    %v255 = vld [vmem:[#allocation5 + $0x500] sm:$0xff]
    %v256 = vld [vmem:[#allocation5 + $0x508] sm:$0xff]
    %v257 = vld [vmem:[#allocation5 + $0x510] sm:$0xff]
    %v258 = vld [vmem:[#allocation5 + $0x518] sm:$0xff]
    %v259 = vld [vmem:[#allocation5 + $0x520] sm:$0xff]
    %v260 = vld [vmem:[#allocation5 + $0x528] sm:$0xff]
    %v261 = vld [vmem:[#allocation5 + $0x530] sm:$0xff]
    %v262 = vld [vmem:[#allocation5 + $0x538] sm:$0xff]
    %v263 = vld [vmem:[#allocation5 + $0x540] sm:$0xff]
    %v264 = vld [vmem:[#allocation5 + $0x548] sm:$0xff]
    %v265 = vld [vmem:[#allocation5 + $0x550] sm:$0xff]
    %v266 = vld [vmem:[#allocation5 + $0x558] sm:$0xff]
    %v267 = vld [vmem:[#allocation5 + $0x560] sm:$0xff]
    %v268 = vld [vmem:[#allocation5 + $0x568] sm:$0xff]
    %v269 = vld [vmem:[#allocation5 + $0x570] sm:$0xff]
    %v270 = vld [vmem:[#allocation5 + $0x578] sm:$0xff]
    %v271 = vld [vmem:[#allocation5 + $0x580] sm:$0xff]
    %v272 = vld [vmem:[#allocation5 + $0x588] sm:$0xff]
    %v273 = vld [vmem:[#allocation5 + $0x590] sm:$0xff]
    %v274 = vld [vmem:[#allocation5 + $0x598] sm:$0xff]
    %v275 = vld [vmem:[#allocation5 + $0x5a0] sm:$0xff]
    %v276 = vld [vmem:[#allocation5 + $0x5a8] sm:$0xff]
    %v277 = vld [vmem:[#allocation5 + $0x5b0] sm:$0xff]
    %v278 = vld [vmem:[#allocation5 + $0x5b8] sm:$0xff]
    %v279 = vld [vmem:[#allocation5 + $0x5c0] sm:$0xff]
    %v280 = vld [vmem:[#allocation5 + $0x5c8] sm:$0xff]
    %v281 = vld [vmem:[#allocation5 + $0x5d0] sm:$0xff]
    %v282 = vld [vmem:[#allocation5 + $0x5d8] sm:$0xff]
    %v283 = vld [vmem:[#allocation5 + $0x5e0] sm:$0xff]
    %v284 = vld [vmem:[#allocation5 + $0x5e8] sm:$0xff]
    %v285 = vld [vmem:[#allocation5 + $0x5f0] sm:$0xff]
    %v286 = vld [vmem:[#allocation5 + $0x5f8] sm:$0xff]
    %v287 = vld [vmem:[#allocation5 + $0x600] sm:$0xff]
    %v288 = vld [vmem:[#allocation5 + $0x608] sm:$0xff]
    %v289 = vld [vmem:[#allocation5 + $0x610] sm:$0xff]
    %v290 = vld [vmem:[#allocation5 + $0x618] sm:$0xff]
    %v291 = vld [vmem:[#allocation7] sm:$0xf]
    %v293 = vperm.slane %v291, 0
    %v294 = vperm.slane %v291, 1
    %v295 = vperm.slane %v291, 2
    %v296 = vperm.slane %v291, 3
    %v497 = vunpack.c.l.b16 %v95
    %v498 = vunpack.c.h.b16 %v95
    %v499 = vunpack.c.l.b16 %v96
    %v500 = vunpack.c.h.b16 %v96
    %v501 = vunpack.c.l.b16 %v97
    %v502 = vunpack.c.h.b16 %v97
    %v503 = vunpack.c.l.b16 %v98
    %v504 = vunpack.c.h.b16 %v98
    %v505 = vunpack.c.l.b16 %v99
    %v506 = vunpack.c.h.b16 %v99
    %v507 = vunpack.c.l.b16 %v100
    %v508 = vunpack.c.h.b16 %v100
    %v509 = vunpack.c.l.b16 %v101
    %v510 = vunpack.c.h.b16 %v101
    %v511 = vunpack.c.l.b16 %v102
    %v512 = vunpack.c.h.b16 %v102
    %v513 = vunpack.c.l.b16 %v103
    %v514 = vunpack.c.h.b16 %v103
    %v515 = vunpack.c.l.b16 %v104
    %v516 = vunpack.c.h.b16 %v104
    %v517 = vunpack.c.l.b16 %v105
    %v518 = vunpack.c.h.b16 %v105
    %v519 = vunpack.c.l.b16 %v106
    %v520 = vunpack.c.h.b16 %v106
    %v521 = vunpack.c.l.b16 %v107
    %v522 = vunpack.c.h.b16 %v107
    %v523 = vunpack.c.l.b16 %v108
    %v524 = vunpack.c.h.b16 %v108
    %v525 = vunpack.c.l.b16 %v109
    %v526 = vunpack.c.h.b16 %v109
    %v527 = vunpack.c.l.b16 %v110
    %v528 = vunpack.c.h.b16 %v110
    %v529 = vunpack.c.l.b16 %v111
    %v530 = vunpack.c.h.b16 %v111
    %v531 = vunpack.c.l.b16 %v112
    %v532 = vunpack.c.h.b16 %v112
    %v533 = vunpack.c.l.b16 %v113
    %v534 = vunpack.c.h.b16 %v113
    %v535 = vunpack.c.l.b16 %v114
    %v536 = vunpack.c.h.b16 %v114
    %v537 = vunpack.c.l.b16 %v115
    %v538 = vunpack.c.h.b16 %v115
    %v539 = vunpack.c.l.b16 %v116
    %v540 = vunpack.c.h.b16 %v116
    %v541 = vunpack.c.l.b16 %v117
    %v542 = vunpack.c.h.b16 %v117
    %v543 = vunpack.c.l.b16 %v118
    %v544 = vunpack.c.h.b16 %v118
    %v545 = vunpack.c.l.b16 %v119
    %v546 = vunpack.c.h.b16 %v119
    %v547 = vunpack.c.l.b16 %v120
    %v548 = vunpack.c.h.b16 %v120
    %v549 = vunpack.c.l.b16 %v121
    %v550 = vunpack.c.h.b16 %v121
    %v551 = vunpack.c.l.b16 %v122
    %v552 = vunpack.c.h.b16 %v122
    %v553 = vunpack.c.l.b16 %v123
    %v554 = vunpack.c.h.b16 %v123
    %v555 = vunpack.c.l.b16 %v124
    %v556 = vunpack.c.h.b16 %v124
    %v557 = vunpack.c.l.b16 %v125
    %v558 = vunpack.c.h.b16 %v125
    %v559 = vunpack.c.l.b16 %v126
    %v560 = vunpack.c.h.b16 %v126
    %v561 = vunpack.c.l.b16 %v127
    %v562 = vunpack.c.h.b16 %v127
    %v563 = vunpack.c.l.b16 %v128
    %v564 = vunpack.c.h.b16 %v128
    %v565 = vunpack.c.l.b16 %v129
    %v566 = vunpack.c.h.b16 %v129
    %v567 = vunpack.c.l.b16 %v130
    %v568 = vunpack.c.h.b16 %v130
    %v569 = vunpack.c.l.b16 %v131
    %v570 = vunpack.c.h.b16 %v131
    %v571 = vunpack.c.l.b16 %v132
    %v572 = vunpack.c.h.b16 %v132
    %v573 = vunpack.c.l.b16 %v133
    %v574 = vunpack.c.h.b16 %v133
    %v575 = vunpack.c.l.b16 %v134
    %v576 = vunpack.c.h.b16 %v134
    %v577 = vunpack.c.l.b16 %v135
    %v578 = vunpack.c.h.b16 %v135
    %v579 = vunpack.c.l.b16 %v136
    %v580 = vunpack.c.h.b16 %v136
    %v581 = vunpack.c.l.b16 %v137
    %v582 = vunpack.c.h.b16 %v137
    %v583 = vunpack.c.l.b16 %v138
    %v584 = vunpack.c.h.b16 %v138
    %v585 = vunpack.c.l.b16 %v139
    %v586 = vunpack.c.h.b16 %v139
    %v587 = vunpack.c.l.b16 %v140
    %v588 = vunpack.c.h.b16 %v140
    %v589 = vunpack.c.l.b16 %v141
    %v590 = vunpack.c.h.b16 %v141
    %v591 = vunpack.c.l.b16 %v142
    %v592 = vunpack.c.h.b16 %v142
    %v593 = vunpack.c.l.b16 %v143
    %v594 = vunpack.c.h.b16 %v143
    %v595 = vunpack.c.l.b16 %v144
    %v596 = vunpack.c.h.b16 %v144
    %v597 = vunpack.c.l.b16 %v145
    %v598 = vunpack.c.h.b16 %v145
    %v599 = vunpack.c.l.b16 %v146
    %v600 = vunpack.c.h.b16 %v146
    %v601 = vunpack.c.l.b16 %v147
    %v602 = vunpack.c.h.b16 %v147
    %v603 = vunpack.c.l.b16 %v148
    %v604 = vunpack.c.h.b16 %v148
    %v605 = vunpack.c.l.b16 %v149
    %v606 = vunpack.c.h.b16 %v149
    %v607 = vunpack.c.l.b16 %v150
    %v608 = vunpack.c.h.b16 %v150
    %v609 = vunpack.c.l.b16 %v151
    %v610 = vunpack.c.h.b16 %v151
    %v611 = vunpack.c.l.b16 %v152
    %v612 = vunpack.c.h.b16 %v152
    %v613 = vunpack.c.l.b16 %v153
    %v614 = vunpack.c.h.b16 %v153
    %v615 = vunpack.c.l.b16 %v154
    %v616 = vunpack.c.h.b16 %v154
    %v617 = vunpack.c.l.b16 %v155
    %v618 = vunpack.c.h.b16 %v155
    %v619 = vunpack.c.l.b16 %v156
    %v620 = vunpack.c.h.b16 %v156
    %v621 = vunpack.c.l.b16 %v157
    %v622 = vunpack.c.h.b16 %v157
    %v623 = vunpack.c.l.b16 %v158
    %v624 = vunpack.c.h.b16 %v158
    %v625 = vunpack.c.l.b16 %v159
    %v626 = vunpack.c.h.b16 %v159
    %v627 = vunpack.c.l.b16 %v160
    %v628 = vunpack.c.h.b16 %v160
    %v629 = vunpack.c.l.b16 %v161
    %v630 = vunpack.c.h.b16 %v161
    %v631 = vunpack.c.l.b16 %v162
    %v632 = vunpack.c.h.b16 %v162
    %v633 = vunpack.c.l.b16 %v163
    %v634 = vunpack.c.h.b16 %v163
    %v635 = vunpack.c.l.b16 %v164
    %v636 = vunpack.c.h.b16 %v164
    %v637 = vunpack.c.l.b16 %v165
    %v638 = vunpack.c.h.b16 %v165
    %v639 = vunpack.c.l.b16 %v166
    %v640 = vunpack.c.h.b16 %v166
    %v641 = vunpack.c.l.b16 %v167
    %v642 = vunpack.c.h.b16 %v167
    %v643 = vunpack.c.l.b16 %v168
    %v644 = vunpack.c.h.b16 %v168
    %v645 = vunpack.c.l.b16 %v169
    %v646 = vunpack.c.h.b16 %v169
    %v647 = vunpack.c.l.b16 %v170
    %v648 = vunpack.c.h.b16 %v170
    %v649 = vunpack.c.l.b16 %v171
    %v650 = vunpack.c.h.b16 %v171
    %v651 = vunpack.c.l.b16 %v172
    %v652 = vunpack.c.h.b16 %v172
    %v653 = vunpack.c.l.b16 %v173
    %v654 = vunpack.c.h.b16 %v173
    %v655 = vunpack.c.l.b16 %v174
    %v656 = vunpack.c.h.b16 %v174
    %v657 = vunpack.c.l.b16 %v175
    %v658 = vunpack.c.h.b16 %v175
    %v659 = vunpack.c.l.b16 %v176
    %v660 = vunpack.c.h.b16 %v176
    %v661 = vunpack.c.l.b16 %v177
    %v662 = vunpack.c.h.b16 %v177
    %v663 = vunpack.c.l.b16 %v178
    %v664 = vunpack.c.h.b16 %v178
    %v665 = vunpack.c.l.b16 %v179
    %v666 = vunpack.c.h.b16 %v179
    %v667 = vunpack.c.l.b16 %v180
    %v668 = vunpack.c.h.b16 %v180
    %v669 = vunpack.c.l.b16 %v181
    %v670 = vunpack.c.h.b16 %v181
    %v671 = vunpack.c.l.b16 %v182
    %v672 = vunpack.c.h.b16 %v182
    %v673 = vunpack.c.l.b16 %v183
    %v674 = vunpack.c.h.b16 %v183
    %v675 = vunpack.c.l.b16 %v184
    %v676 = vunpack.c.h.b16 %v184
    %v677 = vunpack.c.l.b16 %v185
    %v678 = vunpack.c.h.b16 %v185
    %v679 = vunpack.c.l.b16 %v186
    %v680 = vunpack.c.h.b16 %v186
    %v681 = vunpack.c.l.b16 %v187
    %v682 = vunpack.c.h.b16 %v187
    %v683 = vunpack.c.l.b16 %v188
    %v684 = vunpack.c.h.b16 %v188
    %v685 = vunpack.c.l.b16 %v189
    %v686 = vunpack.c.h.b16 %v189
    %v687 = vunpack.c.l.b16 %v190
    %v688 = vunpack.c.h.b16 %v190
    %v689 = vunpack.c.l.b16 %v191
    %v690 = vunpack.c.h.b16 %v191
    %v691 = vunpack.c.l.b16 %v192
    %v692 = vunpack.c.h.b16 %v192
    %v693 = vunpack.c.l.b16 %v193
    %v694 = vunpack.c.h.b16 %v193
    %v695 = vunpack.c.l.b16 %v194
    %v696 = vunpack.c.h.b16 %v194
    %v697 = vunpack.c.l.b16 %v195
    %v698 = vunpack.c.h.b16 %v195
    %v699 = vunpack.c.l.b16 %v196
    %v700 = vunpack.c.h.b16 %v196
    %v701 = vunpack.c.l.b16 %v197
    %v702 = vunpack.c.h.b16 %v197
    %v703 = vunpack.c.l.b16 %v198
    %v704 = vunpack.c.h.b16 %v198
    %v705 = vunpack.c.l.b16 %v199
    %v706 = vunpack.c.h.b16 %v199
    %v707 = vunpack.c.l.b16 %v200
    %v708 = vunpack.c.h.b16 %v200
    %v709 = vunpack.c.l.b16 %v201
    %v710 = vunpack.c.h.b16 %v201
    %v711 = vunpack.c.l.b16 %v202
    %v712 = vunpack.c.h.b16 %v202
    %v713 = vunpack.c.l.b16 %v203
    %v714 = vunpack.c.h.b16 %v203
    %v715 = vunpack.c.l.b16 %v204
    %v716 = vunpack.c.h.b16 %v204
    %v717 = vunpack.c.l.b16 %v205
    %v718 = vunpack.c.h.b16 %v205
    %v719 = vunpack.c.l.b16 %v206
    %v720 = vunpack.c.h.b16 %v206
    %v721 = vunpack.c.l.b16 %v207
    %v722 = vunpack.c.h.b16 %v207
    %v723 = vunpack.c.l.b16 %v208
    %v724 = vunpack.c.h.b16 %v208
    %v725 = vunpack.c.l.b16 %v209
    %v726 = vunpack.c.h.b16 %v209
    %v727 = vunpack.c.l.b16 %v210
    %v728 = vunpack.c.h.b16 %v210
    %v729 = vunpack.c.l.b16 %v211
    %v730 = vunpack.c.h.b16 %v211
    %v731 = vunpack.c.l.b16 %v212
    %v732 = vunpack.c.h.b16 %v212
    %v733 = vunpack.c.l.b16 %v213
    %v734 = vunpack.c.h.b16 %v213
    %v735 = vunpack.c.l.b16 %v214
    %v736 = vunpack.c.h.b16 %v214
    %v737 = vunpack.c.l.b16 %v215
    %v738 = vunpack.c.h.b16 %v215
    %v739 = vunpack.c.l.b16 %v216
    %v740 = vunpack.c.h.b16 %v216
    %v741 = vunpack.c.l.b16 %v217
    %v742 = vunpack.c.h.b16 %v217
    %v743 = vunpack.c.l.b16 %v218
    %v744 = vunpack.c.h.b16 %v218
    %v745 = vunpack.c.l.b16 %v219
    %v746 = vunpack.c.h.b16 %v219
    %v747 = vunpack.c.l.b16 %v220
    %v748 = vunpack.c.h.b16 %v220
    %v749 = vunpack.c.l.b16 %v221
    %v750 = vunpack.c.h.b16 %v221
    %v751 = vunpack.c.l.b16 %v222
    %v752 = vunpack.c.h.b16 %v222
    %v753 = vunpack.c.l.b16 %v223
    %v754 = vunpack.c.h.b16 %v223
    %v755 = vunpack.c.l.b16 %v224
    %v756 = vunpack.c.h.b16 %v224
    %v757 = vunpack.c.l.b16 %v225
    %v758 = vunpack.c.h.b16 %v225
    %v759 = vunpack.c.l.b16 %v226
    %v760 = vunpack.c.h.b16 %v226
    %v761 = vunpack.c.l.b16 %v227
    %v762 = vunpack.c.h.b16 %v227
    %v763 = vunpack.c.l.b16 %v228
    %v764 = vunpack.c.h.b16 %v228
    %v765 = vunpack.c.l.b16 %v229
    %v766 = vunpack.c.h.b16 %v229
    %v767 = vunpack.c.l.b16 %v230
    %v768 = vunpack.c.h.b16 %v230
    %v769 = vunpack.c.l.b16 %v231
    %v770 = vunpack.c.h.b16 %v231
    %v771 = vunpack.c.l.b16 %v232
    %v772 = vunpack.c.h.b16 %v232
    %v773 = vunpack.c.l.b16 %v233
    %v774 = vunpack.c.h.b16 %v233
    %v775 = vunpack.c.l.b16 %v234
    %v776 = vunpack.c.h.b16 %v234
    %v777 = vunpack.c.l.b16 %v235
    %v778 = vunpack.c.h.b16 %v235
    %v779 = vunpack.c.l.b16 %v236
    %v780 = vunpack.c.h.b16 %v236
    %v781 = vunpack.c.l.b16 %v237
    %v782 = vunpack.c.h.b16 %v237
    %v783 = vunpack.c.l.b16 %v238
    %v784 = vunpack.c.h.b16 %v238
    %v785 = vunpack.c.l.b16 %v239
    %v786 = vunpack.c.h.b16 %v239
    %v787 = vunpack.c.l.b16 %v240
    %v788 = vunpack.c.h.b16 %v240
    %v789 = vunpack.c.l.b16 %v241
    %v790 = vunpack.c.h.b16 %v241
    %v791 = vunpack.c.l.b16 %v242
    %v792 = vunpack.c.h.b16 %v242
    %v793 = vunpack.c.l.b16 %v243
    %v794 = vunpack.c.h.b16 %v243
    %v795 = vunpack.c.l.b16 %v244
    %v796 = vunpack.c.h.b16 %v244
    %v797 = vunpack.c.l.b16 %v245
    %v798 = vunpack.c.h.b16 %v245
    %v799 = vunpack.c.l.b16 %v246
    %v800 = vunpack.c.h.b16 %v246
    %v801 = vunpack.c.l.b16 %v247
    %v802 = vunpack.c.h.b16 %v247
    %v803 = vunpack.c.l.b16 %v248
    %v804 = vunpack.c.h.b16 %v248
    %v805 = vunpack.c.l.b16 %v249
    %v806 = vunpack.c.h.b16 %v249
    %v807 = vunpack.c.l.b16 %v250
    %v808 = vunpack.c.h.b16 %v250
    %v809 = vunpack.c.l.b16 %v251
    %v810 = vunpack.c.h.b16 %v251
    %v811 = vunpack.c.l.b16 %v252
    %v812 = vunpack.c.h.b16 %v252
    %v813 = vunpack.c.l.b16 %v253
    %v814 = vunpack.c.h.b16 %v253
    %v815 = vunpack.c.l.b16 %v254
    %v816 = vunpack.c.h.b16 %v254
    %v817 = vunpack.c.l.b16 %v255
    %v818 = vunpack.c.h.b16 %v255
    %v819 = vunpack.c.l.b16 %v256
    %v820 = vunpack.c.h.b16 %v256
    %v821 = vunpack.c.l.b16 %v257
    %v822 = vunpack.c.h.b16 %v257
    %v823 = vunpack.c.l.b16 %v258
    %v824 = vunpack.c.h.b16 %v258
    %v825 = vunpack.c.l.b16 %v259
    %v826 = vunpack.c.h.b16 %v259
    %v827 = vunpack.c.l.b16 %v260
    %v828 = vunpack.c.h.b16 %v260
    %v829 = vunpack.c.l.b16 %v261
    %v830 = vunpack.c.h.b16 %v261
    %v831 = vunpack.c.l.b16 %v262
    %v832 = vunpack.c.h.b16 %v262
    %v833 = vunpack.c.l.b16 %v263
    %v834 = vunpack.c.h.b16 %v263
    %v835 = vunpack.c.l.b16 %v264
    %v836 = vunpack.c.h.b16 %v264
    %v837 = vunpack.c.l.b16 %v265
    %v838 = vunpack.c.h.b16 %v265
    %v839 = vunpack.c.l.b16 %v266
    %v840 = vunpack.c.h.b16 %v266
    %v841 = vunpack.c.l.b16 %v267
    %v842 = vunpack.c.h.b16 %v267
    %v843 = vunpack.c.l.b16 %v268
    %v844 = vunpack.c.h.b16 %v268
    %v845 = vunpack.c.l.b16 %v269
    %v846 = vunpack.c.h.b16 %v269
    %v847 = vunpack.c.l.b16 %v270
    %v848 = vunpack.c.h.b16 %v270
    %v849 = vunpack.c.l.b16 %v271
    %v850 = vunpack.c.h.b16 %v271
    %v851 = vunpack.c.l.b16 %v272
    %v852 = vunpack.c.h.b16 %v272
    %v853 = vunpack.c.l.b16 %v273
    %v854 = vunpack.c.h.b16 %v273
    %v855 = vunpack.c.l.b16 %v274
    %v856 = vunpack.c.h.b16 %v274
    %v857 = vunpack.c.l.b16 %v275
    %v858 = vunpack.c.h.b16 %v275
    %v859 = vunpack.c.l.b16 %v276
    %v860 = vunpack.c.h.b16 %v276
    %v861 = vunpack.c.l.b16 %v277
    %v862 = vunpack.c.h.b16 %v277
    %v863 = vunpack.c.l.b16 %v278
    %v864 = vunpack.c.h.b16 %v278
    %v865 = vunpack.c.l.b16 %v279
    %v866 = vunpack.c.h.b16 %v279
    %v867 = vunpack.c.l.b16 %v280
    %v868 = vunpack.c.h.b16 %v280
    %v869 = vunpack.c.l.b16 %v281
    %v870 = vunpack.c.h.b16 %v281
    %v871 = vunpack.c.l.b16 %v282
    %v872 = vunpack.c.h.b16 %v282
    %v873 = vunpack.c.l.b16 %v283
    %v874 = vunpack.c.h.b16 %v283
    %v875 = vunpack.c.l.b16 %v284
    %v876 = vunpack.c.h.b16 %v284
    %v877 = vunpack.c.l.b16 %v285
    %v878 = vunpack.c.h.b16 %v285
    %v879 = vunpack.c.l.b16 %v286
    %v880 = vunpack.c.h.b16 %v286
    %v881 = vunpack.c.l.b16 %v287
    %v882 = vunpack.c.h.b16 %v287
    %v883 = vunpack.c.l.b16 %v288
    %v884 = vunpack.c.h.b16 %v288
    %v885 = vunpack.c.l.b16 %v289
    %v886 = vunpack.c.h.b16 %v289
    %v887 = vunpack.c.l.b16 %v290
    %v888 = vunpack.c.h.b16 %v290
    %v889 = vpack.c.b16 %v501, %v497
    %v890 = vpack.c.b16 %v502, %v498
    %v891 = vpack.c.b16 %v503, %v499
    %v892 = vpack.c.b16 %v504, %v500
    %v893 = vpack.c.b16 %v509, %v505
    %v894 = vpack.c.b16 %v510, %v506
    %v895 = vpack.c.b16 %v511, %v507
    %v896 = vpack.c.b16 %v512, %v508
    %v897 = vpack.c.b16 %v517, %v513
    %v898 = vpack.c.b16 %v518, %v514
    %v899 = vpack.c.b16 %v519, %v515
    %v900 = vpack.c.b16 %v520, %v516
    %v901 = vpack.c.b16 %v525, %v521
    %v902 = vpack.c.b16 %v526, %v522
    %v903 = vpack.c.b16 %v527, %v523
    %v904 = vpack.c.b16 %v528, %v524
    %v905 = vpack.c.b16 %v533, %v529
    %v906 = vpack.c.b16 %v534, %v530
    %v907 = vpack.c.b16 %v535, %v531
    %v908 = vpack.c.b16 %v536, %v532
    %v909 = vpack.c.b16 %v541, %v537
    %v910 = vpack.c.b16 %v542, %v538
    %v911 = vpack.c.b16 %v543, %v539
    %v912 = vpack.c.b16 %v544, %v540
    %v913 = vpack.c.b16 %v549, %v545
    %v914 = vpack.c.b16 %v550, %v546
    %v915 = vpack.c.b16 %v551, %v547
    %v916 = vpack.c.b16 %v552, %v548
    %v917 = vpack.c.b16 %v557, %v553
    %v918 = vpack.c.b16 %v558, %v554
    %v919 = vpack.c.b16 %v559, %v555
    %v920 = vpack.c.b16 %v560, %v556
    %v921 = vpack.c.b16 %v565, %v561
    %v922 = vpack.c.b16 %v566, %v562
    %v923 = vpack.c.b16 %v567, %v563
    %v924 = vpack.c.b16 %v568, %v564
    %v925 = vpack.c.b16 %v573, %v569
    %v926 = vpack.c.b16 %v574, %v570
    %v927 = vpack.c.b16 %v575, %v571
    %v928 = vpack.c.b16 %v576, %v572
    %v929 = vpack.c.b16 %v581, %v577
    %v930 = vpack.c.b16 %v582, %v578
    %v931 = vpack.c.b16 %v583, %v579
    %v932 = vpack.c.b16 %v584, %v580
    %v933 = vpack.c.b16 %v589, %v585
    %v934 = vpack.c.b16 %v590, %v586
    %v935 = vpack.c.b16 %v591, %v587
    %v936 = vpack.c.b16 %v592, %v588
    %v937 = vpack.c.b16 %v597, %v593
    %v938 = vpack.c.b16 %v598, %v594
    %v939 = vpack.c.b16 %v599, %v595
    %v940 = vpack.c.b16 %v600, %v596
    %v941 = vpack.c.b16 %v605, %v601
    %v942 = vpack.c.b16 %v606, %v602
    %v943 = vpack.c.b16 %v607, %v603
    %v944 = vpack.c.b16 %v608, %v604
    %v945 = vpack.c.b16 %v613, %v609
    %v946 = vpack.c.b16 %v614, %v610
    %v947 = vpack.c.b16 %v615, %v611
    %v948 = vpack.c.b16 %v616, %v612
    %v949 = vpack.c.b16 %v621, %v617
    %v950 = vpack.c.b16 %v622, %v618
    %v951 = vpack.c.b16 %v623, %v619
    %v952 = vpack.c.b16 %v624, %v620
    %v953 = vpack.c.b16 %v629, %v625
    %v954 = vpack.c.b16 %v630, %v626
    %v955 = vpack.c.b16 %v631, %v627
    %v956 = vpack.c.b16 %v632, %v628
    %v957 = vpack.c.b16 %v637, %v633
    %v958 = vpack.c.b16 %v638, %v634
    %v959 = vpack.c.b16 %v639, %v635
    %v960 = vpack.c.b16 %v640, %v636
    %v961 = vpack.c.b16 %v645, %v641
    %v962 = vpack.c.b16 %v646, %v642
    %v963 = vpack.c.b16 %v647, %v643
    %v964 = vpack.c.b16 %v648, %v644
    %v965 = vpack.c.b16 %v653, %v649
    %v966 = vpack.c.b16 %v654, %v650
    %v967 = vpack.c.b16 %v655, %v651
    %v968 = vpack.c.b16 %v656, %v652
    %v969 = vpack.c.b16 %v661, %v657
    %v970 = vpack.c.b16 %v662, %v658
    %v971 = vpack.c.b16 %v663, %v659
    %v972 = vpack.c.b16 %v664, %v660
    %v973 = vpack.c.b16 %v669, %v665
    %v974 = vpack.c.b16 %v670, %v666
    %v975 = vpack.c.b16 %v671, %v667
    %v976 = vpack.c.b16 %v672, %v668
    %v977 = vpack.c.b16 %v677, %v673
    %v978 = vpack.c.b16 %v678, %v674
    %v979 = vpack.c.b16 %v679, %v675
    %v980 = vpack.c.b16 %v680, %v676
    %v981 = vpack.c.b16 %v685, %v681
    %v982 = vpack.c.b16 %v686, %v682
    %v983 = vpack.c.b16 %v687, %v683
    %v984 = vpack.c.b16 %v688, %v684
    %v985 = vpack.c.b16 %v693, %v689
    %v986 = vpack.c.b16 %v694, %v690
    %v987 = vpack.c.b16 %v695, %v691
    %v988 = vpack.c.b16 %v696, %v692
    %v989 = vpack.c.b16 %v701, %v697
    %v990 = vpack.c.b16 %v702, %v698
    %v991 = vpack.c.b16 %v703, %v699
    %v992 = vpack.c.b16 %v704, %v700
    %v993 = vpack.c.b16 %v709, %v705
    %v994 = vpack.c.b16 %v710, %v706
    %v995 = vpack.c.b16 %v711, %v707
    %v996 = vpack.c.b16 %v712, %v708
    %v997 = vpack.c.b16 %v717, %v713
    %v998 = vpack.c.b16 %v718, %v714
    %v999 = vpack.c.b16 %v719, %v715
    %v1000 = vpack.c.b16 %v720, %v716
    %v1001 = vpack.c.b16 %v725, %v721
    %v1002 = vpack.c.b16 %v726, %v722
    %v1003 = vpack.c.b16 %v727, %v723
    %v1004 = vpack.c.b16 %v728, %v724
    %v1005 = vpack.c.b16 %v733, %v729
    %v1006 = vpack.c.b16 %v734, %v730
    %v1007 = vpack.c.b16 %v735, %v731
    %v1008 = vpack.c.b16 %v736, %v732
    %v1009 = vpack.c.b16 %v741, %v737
    %v1010 = vpack.c.b16 %v742, %v738
    %v1011 = vpack.c.b16 %v743, %v739
    %v1012 = vpack.c.b16 %v744, %v740
    %v1013 = vpack.c.b16 %v749, %v745
    %v1014 = vpack.c.b16 %v750, %v746
    %v1015 = vpack.c.b16 %v751, %v747
    %v1016 = vpack.c.b16 %v752, %v748
    %v1017 = vpack.c.b16 %v757, %v753
    %v1018 = vpack.c.b16 %v758, %v754
    %v1019 = vpack.c.b16 %v759, %v755
    %v1020 = vpack.c.b16 %v760, %v756
    %v1021 = vpack.c.b16 %v765, %v761
    %v1022 = vpack.c.b16 %v766, %v762
    %v1023 = vpack.c.b16 %v767, %v763
    %v1024 = vpack.c.b16 %v768, %v764
    %v1025 = vpack.c.b16 %v773, %v769
    %v1026 = vpack.c.b16 %v774, %v770
    %v1027 = vpack.c.b16 %v775, %v771
    %v1028 = vpack.c.b16 %v776, %v772
    %v1029 = vpack.c.b16 %v781, %v777
    %v1030 = vpack.c.b16 %v782, %v778
    %v1031 = vpack.c.b16 %v783, %v779
    %v1032 = vpack.c.b16 %v784, %v780
    %v1033 = vpack.c.b16 %v789, %v785
    %v1034 = vpack.c.b16 %v790, %v786
    %v1035 = vpack.c.b16 %v791, %v787
    %v1036 = vpack.c.b16 %v792, %v788
    %v1037 = vpack.c.b16 %v797, %v793
    %v1038 = vpack.c.b16 %v798, %v794
    %v1039 = vpack.c.b16 %v799, %v795
    %v1040 = vpack.c.b16 %v800, %v796
    %v1041 = vpack.c.b16 %v805, %v801
    %v1042 = vpack.c.b16 %v806, %v802
    %v1043 = vpack.c.b16 %v807, %v803
    %v1044 = vpack.c.b16 %v808, %v804
    %v1045 = vpack.c.b16 %v813, %v809
    %v1046 = vpack.c.b16 %v814, %v810
    %v1047 = vpack.c.b16 %v815, %v811
    %v1048 = vpack.c.b16 %v816, %v812
    %v1049 = vpack.c.b16 %v821, %v817
    %v1050 = vpack.c.b16 %v822, %v818
    %v1051 = vpack.c.b16 %v823, %v819
    %v1052 = vpack.c.b16 %v824, %v820
    %v1053 = vpack.c.b16 %v829, %v825
    %v1054 = vpack.c.b16 %v830, %v826
    %v1055 = vpack.c.b16 %v831, %v827
    %v1056 = vpack.c.b16 %v832, %v828
    %v1057 = vpack.c.b16 %v837, %v833
    %v1058 = vpack.c.b16 %v838, %v834
    %v1059 = vpack.c.b16 %v839, %v835
    %v1060 = vpack.c.b16 %v840, %v836
    %v1061 = vpack.c.b16 %v845, %v841
    %v1062 = vpack.c.b16 %v846, %v842
    %v1063 = vpack.c.b16 %v847, %v843
    %v1064 = vpack.c.b16 %v848, %v844
    %v1065 = vpack.c.b16 %v853, %v849
    %v1066 = vpack.c.b16 %v854, %v850
    %v1067 = vpack.c.b16 %v855, %v851
    %v1068 = vpack.c.b16 %v856, %v852
    %v1069 = vpack.c.b16 %v861, %v857
    %v1070 = vpack.c.b16 %v862, %v858
    %v1071 = vpack.c.b16 %v863, %v859
    %v1072 = vpack.c.b16 %v864, %v860
    %v1073 = vpack.c.b16 %v869, %v865
    %v1074 = vpack.c.b16 %v870, %v866
    %v1075 = vpack.c.b16 %v871, %v867
    %v1076 = vpack.c.b16 %v872, %v868
    %v1077 = vpack.c.b16 %v877, %v873
    %v1078 = vpack.c.b16 %v878, %v874
    %v1079 = vpack.c.b16 %v879, %v875
    %v1080 = vpack.c.b16 %v880, %v876
    %v1081 = vpack.c.b16 %v885, %v881
    %v1082 = vpack.c.b16 %v886, %v882
    %v1083 = vpack.c.b16 %v887, %v883
    %v1084 = vpack.c.b16 %v888, %v884
    %vm1281 = vcmask 130048
    %v1283 = vsel %vm1281, %v94, 0
    %1285 = vmatpush.bf16.msra.mxu0 %v917
    %1286 = vmatpush.bf16.msra.mxu0 %v913
    %1287 = vmatpush.bf16.msra.mxu0 %v909
    %1288 = vmatpush.bf16.msra.mxu0 %v905
    %1289 = vmatpush.bf16.msra.mxu0 %v901
    %1290 = vmatpush.bf16.msra.mxu0 %v897
    %1291 = vmatpush.bf16.msra.mxu0 %v893
    %1292 = vmatpush.bf16.msra.mxu0 %v889
    %1293 = vmatmul.bf16.gmra.mxu0 %v88
    %v1294 = vpop.f32.mrf.mxu0
    %v1295 = vadd.f32 %v293, %v1294
    %v1296 = vpop.f32.mrf.mxu0
    %1297 = vdwg.mxu0
    %1298 = vmatpush.bf16.msra.mxu0 %v949
    %1299 = vmatpush.bf16.msra.mxu0 %v945
    %1300 = vmatpush.bf16.msra.mxu0 %v941
    %1301 = vmatpush.bf16.msra.mxu0 %v937
    %1302 = vmatpush.bf16.msra.mxu0 %v933
    %1303 = vmatpush.bf16.msra.mxu0 %v929
    %1304 = vmatpush.bf16.msra.mxu0 %v925
    %1305 = vmatpush.bf16.msra.mxu0 %v921
    %1306 = vmatmul.bf16.gmra.mxu0 %v89
    %v1307 = vpop.f32.mrf.mxu0
    %v1308 = vadd.f32 %v1295, %v1307
    %v1309 = vpop.f32.mrf.mxu0
    %1310 = vdwg.mxu0
    %1311 = vmatpush.bf16.msra.mxu0 %v981
    %1312 = vmatpush.bf16.msra.mxu0 %v977
    %1313 = vmatpush.bf16.msra.mxu0 %v973
    %1314 = vmatpush.bf16.msra.mxu0 %v969
    %1315 = vmatpush.bf16.msra.mxu0 %v965
    %1316 = vmatpush.bf16.msra.mxu0 %v961
    %1317 = vmatpush.bf16.msra.mxu0 %v957
    %1318 = vmatpush.bf16.msra.mxu0 %v953
    %1319 = vmatmul.bf16.gmra.mxu0 %v90
    %v1320 = vpop.f32.mrf.mxu0
    %v1321 = vadd.f32 %v1308, %v1320
    %v1322 = vpop.f32.mrf.mxu0
    %1323 = vdwg.mxu0
    %1324 = vmatpush.bf16.msra.mxu0 %v1013
    %1325 = vmatpush.bf16.msra.mxu0 %v1009
    %1326 = vmatpush.bf16.msra.mxu0 %v1005
    %1327 = vmatpush.bf16.msra.mxu0 %v1001
    %1328 = vmatpush.bf16.msra.mxu0 %v997
    %1329 = vmatpush.bf16.msra.mxu0 %v993
    %1330 = vmatpush.bf16.msra.mxu0 %v989
    %1331 = vmatpush.bf16.msra.mxu0 %v985
    %1332 = vmatmul.bf16.gmra.mxu0 %v91
    %v1333 = vpop.f32.mrf.mxu0
    %v1334 = vadd.f32 %v1321, %v1333
    %v1335 = vpop.f32.mrf.mxu0
    %1336 = vdwg.mxu0
    %1337 = vmatpush.bf16.msra.mxu0 %v1045
    %1338 = vmatpush.bf16.msra.mxu0 %v1041
    %1339 = vmatpush.bf16.msra.mxu0 %v1037
    %1340 = vmatpush.bf16.msra.mxu0 %v1033
    %1341 = vmatpush.bf16.msra.mxu0 %v1029
    %1342 = vmatpush.bf16.msra.mxu0 %v1025
    %1343 = vmatpush.bf16.msra.mxu0 %v1021
    %1344 = vmatpush.bf16.msra.mxu0 %v1017
    %1345 = vmatmul.bf16.gmra.mxu0 %v92
    %v1346 = vpop.f32.mrf.mxu0
    %v1347 = vadd.f32 %v1334, %v1346
    %v1348 = vpop.f32.mrf.mxu0
    %1349 = vdwg.mxu0
    %1350 = vmatpush.bf16.msra.mxu0 %v1077
    %1351 = vmatpush.bf16.msra.mxu0 %v1073
    %1352 = vmatpush.bf16.msra.mxu0 %v1069
    %1353 = vmatpush.bf16.msra.mxu0 %v1065
    %1354 = vmatpush.bf16.msra.mxu0 %v1061
    %1355 = vmatpush.bf16.msra.mxu0 %v1057
    %1356 = vmatpush.bf16.msra.mxu0 %v1053
    %1357 = vmatpush.bf16.msra.mxu0 %v1049
    %1358 = vmatmul.bf16.gmra.mxu0 %v93
    %v1359 = vpop.f32.mrf.mxu0
    %v1360 = vadd.f32 %v1347, %v1359
    %v1361 = vpop.f32.mrf.mxu0
    %1362 = vdwg.mxu0
    %1363 = vmatpush.bf16.msra.mxu0 0
    %1364 = vmatpush.bf16.msra.mxu0 0
    %1365 = vmatpush.bf16.msra.mxu0 0
    %1366 = vmatpush.bf16.msra.mxu0 0
    %1367 = vmatpush.bf16.msra.mxu0 0
    %1368 = vmatpush.bf16.msra.mxu0 0
    %1369 = vmatpush.bf16.msra.mxu0 0
    %1370 = vmatpush.bf16.msra.mxu0 %v1081
    %1371 = vmatmul.bf16.gmra.mxu0 %v1283
    %v1372 = vpop.f32.mrf.mxu0
    %v1373 = vadd.f32 %v1360, %v1372
    %v1374 = vpop.f32.mrf.mxu0
    %1375 = vdwg.mxu0
    %1376 = vmatpush.bf16.msra.mxu0 %v918
    %1377 = vmatpush.bf16.msra.mxu0 %v914
    %1378 = vmatpush.bf16.msra.mxu0 %v910
    %1379 = vmatpush.bf16.msra.mxu0 %v906
    %1380 = vmatpush.bf16.msra.mxu0 %v902
    %1381 = vmatpush.bf16.msra.mxu0 %v898
    %1382 = vmatpush.bf16.msra.mxu0 %v894
    %1383 = vmatpush.bf16.msra.mxu0 %v890
    %1384 = vmatmul.bf16.gmra.mxu0 %v88
    %v1385 = vpop.f32.mrf.mxu0
    %v1386 = vadd.f32 %v294, %v1385
    %v1387 = vpop.f32.mrf.mxu0
    %1388 = vdwg.mxu0
    %1389 = vmatpush.bf16.msra.mxu0 %v950
    %1390 = vmatpush.bf16.msra.mxu0 %v946
    %1391 = vmatpush.bf16.msra.mxu0 %v942
    %1392 = vmatpush.bf16.msra.mxu0 %v938
    %1393 = vmatpush.bf16.msra.mxu0 %v934
    %1394 = vmatpush.bf16.msra.mxu0 %v930
    %1395 = vmatpush.bf16.msra.mxu0 %v926
    %1396 = vmatpush.bf16.msra.mxu0 %v922
    %1397 = vmatmul.bf16.gmra.mxu0 %v89
    %v1398 = vpop.f32.mrf.mxu0
    %v1399 = vadd.f32 %v1386, %v1398
    %v1400 = vpop.f32.mrf.mxu0
    %1401 = vdwg.mxu0
    %1402 = vmatpush.bf16.msra.mxu0 %v982
    %1403 = vmatpush.bf16.msra.mxu0 %v978
    %1404 = vmatpush.bf16.msra.mxu0 %v974
    %1405 = vmatpush.bf16.msra.mxu0 %v970
    %1406 = vmatpush.bf16.msra.mxu0 %v966
    %1407 = vmatpush.bf16.msra.mxu0 %v962
    %1408 = vmatpush.bf16.msra.mxu0 %v958
    %1409 = vmatpush.bf16.msra.mxu0 %v954
    %1410 = vmatmul.bf16.gmra.mxu0 %v90
    %v1411 = vpop.f32.mrf.mxu0
    %v1412 = vadd.f32 %v1399, %v1411
    %v1413 = vpop.f32.mrf.mxu0
    %1414 = vdwg.mxu0
    %1415 = vmatpush.bf16.msra.mxu0 %v1014
    %1416 = vmatpush.bf16.msra.mxu0 %v1010
    %1417 = vmatpush.bf16.msra.mxu0 %v1006
    %1418 = vmatpush.bf16.msra.mxu0 %v1002
    %1419 = vmatpush.bf16.msra.mxu0 %v998
    %1420 = vmatpush.bf16.msra.mxu0 %v994
    %1421 = vmatpush.bf16.msra.mxu0 %v990
    %1422 = vmatpush.bf16.msra.mxu0 %v986
    %1423 = vmatmul.bf16.gmra.mxu0 %v91
    %v1424 = vpop.f32.mrf.mxu0
    %v1425 = vadd.f32 %v1412, %v1424
    %v1426 = vpop.f32.mrf.mxu0
    %1427 = vdwg.mxu0
    %1428 = vmatpush.bf16.msra.mxu0 %v1046
    %1429 = vmatpush.bf16.msra.mxu0 %v1042
    %1430 = vmatpush.bf16.msra.mxu0 %v1038
    %1431 = vmatpush.bf16.msra.mxu0 %v1034
    %1432 = vmatpush.bf16.msra.mxu0 %v1030
    %1433 = vmatpush.bf16.msra.mxu0 %v1026
    %1434 = vmatpush.bf16.msra.mxu0 %v1022
    %1435 = vmatpush.bf16.msra.mxu0 %v1018
    %1436 = vmatmul.bf16.gmra.mxu0 %v92
    %v1437 = vpop.f32.mrf.mxu0
    %v1438 = vadd.f32 %v1425, %v1437
    %v1439 = vpop.f32.mrf.mxu0
    %1440 = vdwg.mxu0
    %1441 = vmatpush.bf16.msra.mxu0 %v1078
    %1442 = vmatpush.bf16.msra.mxu0 %v1074
    %1443 = vmatpush.bf16.msra.mxu0 %v1070
    %1444 = vmatpush.bf16.msra.mxu0 %v1066
    %1445 = vmatpush.bf16.msra.mxu0 %v1062
    %1446 = vmatpush.bf16.msra.mxu0 %v1058
    %1447 = vmatpush.bf16.msra.mxu0 %v1054
    %1448 = vmatpush.bf16.msra.mxu0 %v1050
    %1449 = vmatmul.bf16.gmra.mxu0 %v93
    %v1450 = vpop.f32.mrf.mxu0
    %v1451 = vadd.f32 %v1438, %v1450
    %v1452 = vpop.f32.mrf.mxu0
    %1453 = vdwg.mxu0
    %1454 = vmatpush.bf16.msra.mxu0 0
    %1455 = vmatpush.bf16.msra.mxu0 0
    %1456 = vmatpush.bf16.msra.mxu0 0
    %1457 = vmatpush.bf16.msra.mxu0 0
    %1458 = vmatpush.bf16.msra.mxu0 0
    %1459 = vmatpush.bf16.msra.mxu0 0
    %1460 = vmatpush.bf16.msra.mxu0 0
    %1461 = vmatpush.bf16.msra.mxu0 %v1082
    %1462 = vmatmul.bf16.gmra.mxu0 %v1283
    %v1463 = vpop.f32.mrf.mxu0
    %v1464 = vadd.f32 %v1451, %v1463
    %v1465 = vpop.f32.mrf.mxu0
    %1466 = vdwg.mxu0
    %1467 = vmatpush.bf16.msra.mxu0 %v919
    %1468 = vmatpush.bf16.msra.mxu0 %v915
    %1469 = vmatpush.bf16.msra.mxu0 %v911
    %1470 = vmatpush.bf16.msra.mxu0 %v907
    %1471 = vmatpush.bf16.msra.mxu0 %v903
    %1472 = vmatpush.bf16.msra.mxu0 %v899
    %1473 = vmatpush.bf16.msra.mxu0 %v895
    %1474 = vmatpush.bf16.msra.mxu0 %v891
    %1475 = vmatmul.bf16.gmra.mxu0 %v88
    %v1476 = vpop.f32.mrf.mxu0
    %v1477 = vadd.f32 %v295, %v1476
    %v1478 = vpop.f32.mrf.mxu0
    %1479 = vdwg.mxu0
    %1480 = vmatpush.bf16.msra.mxu0 %v951
    %1481 = vmatpush.bf16.msra.mxu0 %v947
    %1482 = vmatpush.bf16.msra.mxu0 %v943
    %1483 = vmatpush.bf16.msra.mxu0 %v939
    %1484 = vmatpush.bf16.msra.mxu0 %v935
    %1485 = vmatpush.bf16.msra.mxu0 %v931
    %1486 = vmatpush.bf16.msra.mxu0 %v927
    %1487 = vmatpush.bf16.msra.mxu0 %v923
    %1488 = vmatmul.bf16.gmra.mxu0 %v89
    %v1489 = vpop.f32.mrf.mxu0
    %v1490 = vadd.f32 %v1477, %v1489
    %v1491 = vpop.f32.mrf.mxu0
    %1492 = vdwg.mxu0
    %1493 = vmatpush.bf16.msra.mxu0 %v983
    %1494 = vmatpush.bf16.msra.mxu0 %v979
    %1495 = vmatpush.bf16.msra.mxu0 %v975
    %1496 = vmatpush.bf16.msra.mxu0 %v971
    %1497 = vmatpush.bf16.msra.mxu0 %v967
    %1498 = vmatpush.bf16.msra.mxu0 %v963
    %1499 = vmatpush.bf16.msra.mxu0 %v959
    %1500 = vmatpush.bf16.msra.mxu0 %v955
    %1501 = vmatmul.bf16.gmra.mxu0 %v90
    %v1502 = vpop.f32.mrf.mxu0
    %v1503 = vadd.f32 %v1490, %v1502
    %v1504 = vpop.f32.mrf.mxu0
    %1505 = vdwg.mxu0
    %1506 = vmatpush.bf16.msra.mxu0 %v1015
    %1507 = vmatpush.bf16.msra.mxu0 %v1011
    %1508 = vmatpush.bf16.msra.mxu0 %v1007
    %1509 = vmatpush.bf16.msra.mxu0 %v1003
    %1510 = vmatpush.bf16.msra.mxu0 %v999
    %1511 = vmatpush.bf16.msra.mxu0 %v995
    %1512 = vmatpush.bf16.msra.mxu0 %v991
    %1513 = vmatpush.bf16.msra.mxu0 %v987
    %1514 = vmatmul.bf16.gmra.mxu0 %v91
    %v1515 = vpop.f32.mrf.mxu0
    %v1516 = vadd.f32 %v1503, %v1515
    %v1517 = vpop.f32.mrf.mxu0
    %1518 = vdwg.mxu0
    %1519 = vmatpush.bf16.msra.mxu0 %v1047
    %1520 = vmatpush.bf16.msra.mxu0 %v1043
    %1521 = vmatpush.bf16.msra.mxu0 %v1039
    %1522 = vmatpush.bf16.msra.mxu0 %v1035
    %1523 = vmatpush.bf16.msra.mxu0 %v1031
    %1524 = vmatpush.bf16.msra.mxu0 %v1027
    %1525 = vmatpush.bf16.msra.mxu0 %v1023
    %1526 = vmatpush.bf16.msra.mxu0 %v1019
    %1527 = vmatmul.bf16.gmra.mxu0 %v92
    %v1528 = vpop.f32.mrf.mxu0
    %v1529 = vadd.f32 %v1516, %v1528
    %v1530 = vpop.f32.mrf.mxu0
    %1531 = vdwg.mxu0
    %1532 = vmatpush.bf16.msra.mxu0 %v1079
    %1533 = vmatpush.bf16.msra.mxu0 %v1075
    %1534 = vmatpush.bf16.msra.mxu0 %v1071
    %1535 = vmatpush.bf16.msra.mxu0 %v1067
    %1536 = vmatpush.bf16.msra.mxu0 %v1063
    %1537 = vmatpush.bf16.msra.mxu0 %v1059
    %1538 = vmatpush.bf16.msra.mxu0 %v1055
    %1539 = vmatpush.bf16.msra.mxu0 %v1051
    %1540 = vmatmul.bf16.gmra.mxu0 %v93
    %v1541 = vpop.f32.mrf.mxu0
    %v1542 = vadd.f32 %v1529, %v1541
    %v1543 = vpop.f32.mrf.mxu0
    %1544 = vdwg.mxu0
    %1545 = vmatpush.bf16.msra.mxu0 0
    %1546 = vmatpush.bf16.msra.mxu0 0
    %1547 = vmatpush.bf16.msra.mxu0 0
    %1548 = vmatpush.bf16.msra.mxu0 0
    %1549 = vmatpush.bf16.msra.mxu0 0
    %1550 = vmatpush.bf16.msra.mxu0 0
    %1551 = vmatpush.bf16.msra.mxu0 0
    %1552 = vmatpush.bf16.msra.mxu0 %v1083
    %1553 = vmatmul.bf16.gmra.mxu0 %v1283
    %v1554 = vpop.f32.mrf.mxu0
    %v1555 = vadd.f32 %v1542, %v1554
    %v1556 = vpop.f32.mrf.mxu0
    %1557 = vdwg.mxu0
    %1558 = vmatpush.bf16.msra.mxu0 %v920
    %1559 = vmatpush.bf16.msra.mxu0 %v916
    %1560 = vmatpush.bf16.msra.mxu0 %v912
    %1561 = vmatpush.bf16.msra.mxu0 %v908
    %1562 = vmatpush.bf16.msra.mxu0 %v904
    %1563 = vmatpush.bf16.msra.mxu0 %v900
    %1564 = vmatpush.bf16.msra.mxu0 %v896
    %1565 = vmatpush.bf16.msra.mxu0 %v892
    %1566 = vmatmul.bf16.gmra.mxu0 %v88
    %v1567 = vpop.f32.mrf.mxu0
    %v1568 = vadd.f32 %v296, %v1567
    %v1569 = vpop.f32.mrf.mxu0
    %1570 = vdwg.mxu0
    %1571 = vmatpush.bf16.msra.mxu0 %v952
    %1572 = vmatpush.bf16.msra.mxu0 %v948
    %1573 = vmatpush.bf16.msra.mxu0 %v944
    %1574 = vmatpush.bf16.msra.mxu0 %v940
    %1575 = vmatpush.bf16.msra.mxu0 %v936
    %1576 = vmatpush.bf16.msra.mxu0 %v932
    %1577 = vmatpush.bf16.msra.mxu0 %v928
    %1578 = vmatpush.bf16.msra.mxu0 %v924
    %1579 = vmatmul.bf16.gmra.mxu0 %v89
    %v1580 = vpop.f32.mrf.mxu0
    %v1581 = vadd.f32 %v1568, %v1580
    %v1582 = vpop.f32.mrf.mxu0
    %1583 = vdwg.mxu0
    %1584 = vmatpush.bf16.msra.mxu0 %v984
    %1585 = vmatpush.bf16.msra.mxu0 %v980
    %1586 = vmatpush.bf16.msra.mxu0 %v976
    %1587 = vmatpush.bf16.msra.mxu0 %v972
    %1588 = vmatpush.bf16.msra.mxu0 %v968
    %1589 = vmatpush.bf16.msra.mxu0 %v964
    %1590 = vmatpush.bf16.msra.mxu0 %v960
    %1591 = vmatpush.bf16.msra.mxu0 %v956
    %1592 = vmatmul.bf16.gmra.mxu0 %v90
    %v1593 = vpop.f32.mrf.mxu0
    %v1594 = vadd.f32 %v1581, %v1593
    %v1595 = vpop.f32.mrf.mxu0
    %1596 = vdwg.mxu0
    %1597 = vmatpush.bf16.msra.mxu0 %v1016
    %1598 = vmatpush.bf16.msra.mxu0 %v1012
    %1599 = vmatpush.bf16.msra.mxu0 %v1008
    %1600 = vmatpush.bf16.msra.mxu0 %v1004
    %1601 = vmatpush.bf16.msra.mxu0 %v1000
    %1602 = vmatpush.bf16.msra.mxu0 %v996
    %1603 = vmatpush.bf16.msra.mxu0 %v992
    %1604 = vmatpush.bf16.msra.mxu0 %v988
    %1605 = vmatmul.bf16.gmra.mxu0 %v91
    %v1606 = vpop.f32.mrf.mxu0
    %v1607 = vadd.f32 %v1594, %v1606
    %v1608 = vpop.f32.mrf.mxu0
    %1609 = vdwg.mxu0
    %1610 = vmatpush.bf16.msra.mxu0 %v1048
    %1611 = vmatpush.bf16.msra.mxu0 %v1044
    %1612 = vmatpush.bf16.msra.mxu0 %v1040
    %1613 = vmatpush.bf16.msra.mxu0 %v1036
    %1614 = vmatpush.bf16.msra.mxu0 %v1032
    %1615 = vmatpush.bf16.msra.mxu0 %v1028
    %1616 = vmatpush.bf16.msra.mxu0 %v1024
    %1617 = vmatpush.bf16.msra.mxu0 %v1020
    %1618 = vmatmul.bf16.gmra.mxu0 %v92
    %v1619 = vpop.f32.mrf.mxu0
    %v1620 = vadd.f32 %v1607, %v1619
    %v1621 = vpop.f32.mrf.mxu0
    %1622 = vdwg.mxu0
    %1623 = vmatpush.bf16.msra.mxu0 %v1080
    %1624 = vmatpush.bf16.msra.mxu0 %v1076
    %1625 = vmatpush.bf16.msra.mxu0 %v1072
    %1626 = vmatpush.bf16.msra.mxu0 %v1068
    %1627 = vmatpush.bf16.msra.mxu0 %v1064
    %1628 = vmatpush.bf16.msra.mxu0 %v1060
    %1629 = vmatpush.bf16.msra.mxu0 %v1056
    %1630 = vmatpush.bf16.msra.mxu0 %v1052
    %1631 = vmatmul.bf16.gmra.mxu0 %v93
    %v1632 = vpop.f32.mrf.mxu0
    %v1633 = vadd.f32 %v1620, %v1632
    %v1634 = vpop.f32.mrf.mxu0
    %1635 = vdwg.mxu0
    %1636 = vmatpush.bf16.msra.mxu0 0
    %1637 = vmatpush.bf16.msra.mxu0 0
    %1638 = vmatpush.bf16.msra.mxu0 0
    %1639 = vmatpush.bf16.msra.mxu0 0
    %1640 = vmatpush.bf16.msra.mxu0 0
    %1641 = vmatpush.bf16.msra.mxu0 0
    %1642 = vmatpush.bf16.msra.mxu0 0
    %1643 = vmatpush.bf16.msra.mxu0 %v1084
    %1644 = vmatmul.bf16.gmra.mxu0 %v1283
    %v1645 = vpop.f32.mrf.mxu0
    %v1646 = vadd.f32 %v1633, %v1645
    %v1647 = vpop.f32.mrf.mxu0
    %1648 = vdwg.mxu0
    %v1649 = vmax.f32 %v1373, 0.0
    %v1650 = vmax.f32 %v1464, 0.0
    %v1651 = vmax.f32 %v1555, 0.0
    %v1652 = vmax.f32 %v1646, 0.0
    %v1653 = vpack.c.bf16 %v1649, %v1649
    %v1654 = vpack.c.bf16 %v1650, %v1650
    %v1655 = vpack.c.bf16 %v1651, %v1651
    %v1656 = vpack.c.bf16 %v1652, %v1652
    %v1657 = vld [vmem:[#allocation8] sm:$0xf]
    %v1658 = vld [vmem:[#allocation8 + $0x4] sm:$0xf]
    %v1659 = vld [vmem:[#allocation8 + $0x8] sm:$0xf]
    %v1660 = vld [vmem:[#allocation8 + $0xc] sm:$0xf]
    %v1661 = vld [vmem:[#allocation8 + $0x10] sm:$0xf]
    %v1662 = vld [vmem:[#allocation8 + $0x14] sm:$0xf]
    %v1663 = vld [vmem:[#allocation8 + $0x18] sm:$0xf]
    %v1664 = vld [vmem:[#allocation8 + $0x1c] sm:$0xf]
    %v1665 = vld [vmem:[#allocation8 + $0x20] sm:$0xf]
    %v1666 = vld [vmem:[#allocation8 + $0x24] sm:$0xf]
    %v1667 = vld [vmem:[#allocation8 + $0x28] sm:$0xf]
    %v1668 = vld [vmem:[#allocation8 + $0x2c] sm:$0xf]
    %v1669 = vld [vmem:[#allocation8 + $0x30] sm:$0xf]
    %v1670 = vld [vmem:[#allocation8 + $0x34] sm:$0xf]
    %v1671 = vld [vmem:[#allocation8 + $0x38] sm:$0xf]
    %v1672 = vld [vmem:[#allocation8 + $0x3c] sm:$0xf]
    %v1673 = vld [vmem:[#allocation8 + $0x40] sm:$0xf]
    %v1674 = vld [vmem:[#allocation8 + $0x44] sm:$0xf]
    %v1675 = vld [vmem:[#allocation8 + $0x48] sm:$0xf]
    %v1676 = vld [vmem:[#allocation8 + $0x4c] sm:$0xf]
    %v1677 = vld [vmem:[#allocation8 + $0x50] sm:$0xf]
    %v1678 = vld [vmem:[#allocation8 + $0x54] sm:$0xf]
    %v1679 = vld [vmem:[#allocation8 + $0x58] sm:$0xf]
    %v1680 = vld [vmem:[#allocation8 + $0x5c] sm:$0xf]
    %v1681 = vld [vmem:[#allocation8 + $0x60] sm:$0xf]
    %v1682 = vld [vmem:[#allocation8 + $0x64] sm:$0xf]
    %v1683 = vld [vmem:[#allocation8 + $0x68] sm:$0xf]
    %v1684 = vld [vmem:[#allocation8 + $0x6c] sm:$0xf]
    %v1685 = vld [vmem:[#allocation8 + $0x70] sm:$0xf]
    %v1686 = vld [vmem:[#allocation8 + $0x74] sm:$0xf]
    %v1687 = vld [vmem:[#allocation8 + $0x78] sm:$0xf]
    %v1688 = vld [vmem:[#allocation8 + $0x7c] sm:$0xf]
    %v1689 = vld [vmem:[#allocation8 + $0x80] sm:$0xf]
    %v1690 = vld [vmem:[#allocation8 + $0x84] sm:$0xf]
    %v1691 = vld [vmem:[#allocation8 + $0x88] sm:$0xf]
    %v1692 = vld [vmem:[#allocation8 + $0x8c] sm:$0xf]
    %v1693 = vld [vmem:[#allocation8 + $0x90] sm:$0xf]
    %v1694 = vld [vmem:[#allocation8 + $0x94] sm:$0xf]
    %v1695 = vld [vmem:[#allocation8 + $0x98] sm:$0xf]
    %v1696 = vld [vmem:[#allocation8 + $0x9c] sm:$0xf]
    %v1697 = vld [vmem:[#allocation8 + $0xa0] sm:$0xf]
    %v1698 = vld [vmem:[#allocation8 + $0xa4] sm:$0xf]
    %v1699 = vld [vmem:[#allocation8 + $0xa8] sm:$0xf]
    %v1700 = vld [vmem:[#allocation8 + $0xac] sm:$0xf]
    %v1701 = vld [vmem:[#allocation8 + $0xb0] sm:$0xf]
    %v1702 = vld [vmem:[#allocation8 + $0xb4] sm:$0xf]
    %v1703 = vld [vmem:[#allocation8 + $0xb8] sm:$0xf]
    %v1704 = vld [vmem:[#allocation8 + $0xbc] sm:$0xf]
    %v1705 = vld [vmem:[#allocation8 + $0xc0] sm:$0xf]
    %v1706 = vld [vmem:[#allocation8 + $0xc4] sm:$0xf]
    %v1707 = vld [vmem:[#allocation8 + $0xc8] sm:$0xf]
    %v1708 = vld [vmem:[#allocation8 + $0xcc] sm:$0xf]
    %v1709 = vld [vmem:[#allocation8 + $0xd0] sm:$0xf]
    %v1710 = vld [vmem:[#allocation8 + $0xd4] sm:$0xf]
    %v1711 = vld [vmem:[#allocation8 + $0xd8] sm:$0xf]
    %v1712 = vld [vmem:[#allocation8 + $0xdc] sm:$0xf]
    %v1713 = vld [vmem:[#allocation8 + $0xe0] sm:$0xf]
    %v1714 = vld [vmem:[#allocation8 + $0xe4] sm:$0xf]
    %v1715 = vld [vmem:[#allocation8 + $0xe8] sm:$0xf]
    %v1716 = vld [vmem:[#allocation8 + $0xec] sm:$0xf]
    %v1717 = vld [vmem:[#allocation8 + $0xf0] sm:$0xf]
    %v1718 = vld [vmem:[#allocation8 + $0xf4] sm:$0xf]
    %v1719 = vld [vmem:[#allocation8 + $0xf8] sm:$0xf]
    %v1720 = vld [vmem:[#allocation8 + $0xfc] sm:$0xf]
    %v1721 = vld [vmem:[%s4] sm:$0x1]
    %v1723 = vperm.slane %v1721, 0
    %v1789 = vunpack.c.l.b16 %v1657
    %v1790 = vunpack.c.l.b16 %v1658
    %v1791 = vunpack.c.l.b16 %v1659
    %v1792 = vunpack.c.l.b16 %v1660
    %v1793 = vunpack.c.l.b16 %v1661
    %v1794 = vunpack.c.l.b16 %v1662
    %v1795 = vunpack.c.l.b16 %v1663
    %v1796 = vunpack.c.l.b16 %v1664
    %v1797 = vunpack.c.l.b16 %v1665
    %v1798 = vunpack.c.l.b16 %v1666
    %v1799 = vunpack.c.l.b16 %v1667
    %v1800 = vunpack.c.l.b16 %v1668
    %v1801 = vunpack.c.l.b16 %v1669
    %v1802 = vunpack.c.l.b16 %v1670
    %v1803 = vunpack.c.l.b16 %v1671
    %v1804 = vunpack.c.l.b16 %v1672
    %v1805 = vunpack.c.l.b16 %v1673
    %v1806 = vunpack.c.l.b16 %v1674
    %v1807 = vunpack.c.l.b16 %v1675
    %v1808 = vunpack.c.l.b16 %v1676
    %v1809 = vunpack.c.l.b16 %v1677
    %v1810 = vunpack.c.l.b16 %v1678
    %v1811 = vunpack.c.l.b16 %v1679
    %v1812 = vunpack.c.l.b16 %v1680
    %v1813 = vunpack.c.l.b16 %v1681
    %v1814 = vunpack.c.l.b16 %v1682
    %v1815 = vunpack.c.l.b16 %v1683
    %v1816 = vunpack.c.l.b16 %v1684
    %v1817 = vunpack.c.l.b16 %v1685
    %v1818 = vunpack.c.l.b16 %v1686
    %v1819 = vunpack.c.l.b16 %v1687
    %v1820 = vunpack.c.l.b16 %v1688
    %v1821 = vunpack.c.l.b16 %v1689
    %v1822 = vunpack.c.l.b16 %v1690
    %v1823 = vunpack.c.l.b16 %v1691
    %v1824 = vunpack.c.l.b16 %v1692
    %v1825 = vunpack.c.l.b16 %v1693
    %v1826 = vunpack.c.l.b16 %v1694
    %v1827 = vunpack.c.l.b16 %v1695
    %v1828 = vunpack.c.l.b16 %v1696
    %v1829 = vunpack.c.l.b16 %v1697
    %v1830 = vunpack.c.l.b16 %v1698
    %v1831 = vunpack.c.l.b16 %v1699
    %v1832 = vunpack.c.l.b16 %v1700
    %v1833 = vunpack.c.l.b16 %v1701
    %v1834 = vunpack.c.l.b16 %v1702
    %v1835 = vunpack.c.l.b16 %v1703
    %v1836 = vunpack.c.l.b16 %v1704
    %v1837 = vunpack.c.l.b16 %v1705
    %v1838 = vunpack.c.l.b16 %v1706
    %v1839 = vunpack.c.l.b16 %v1707
    %v1840 = vunpack.c.l.b16 %v1708
    %v1841 = vunpack.c.l.b16 %v1709
    %v1842 = vunpack.c.l.b16 %v1710
    %v1843 = vunpack.c.l.b16 %v1711
    %v1844 = vunpack.c.l.b16 %v1712
    %v1845 = vunpack.c.l.b16 %v1713
    %v1846 = vunpack.c.l.b16 %v1714
    %v1847 = vunpack.c.l.b16 %v1715
    %v1848 = vunpack.c.l.b16 %v1716
    %v1849 = vunpack.c.l.b16 %v1717
    %v1850 = vunpack.c.l.b16 %v1718
    %v1851 = vunpack.c.l.b16 %v1719
    %v1852 = vunpack.c.l.b16 %v1720
    %v1853 = vpack.c.b16 %v1790, %v1789
    %v1854 = vpack.c.b16 %v1792, %v1791
    %v1855 = vpack.c.b16 %v1794, %v1793
    %v1856 = vpack.c.b16 %v1796, %v1795
    %v1857 = vpack.c.b16 %v1798, %v1797
    %v1858 = vpack.c.b16 %v1800, %v1799
    %v1859 = vpack.c.b16 %v1802, %v1801
    %v1860 = vpack.c.b16 %v1804, %v1803
    %v1861 = vpack.c.b16 %v1806, %v1805
    %v1862 = vpack.c.b16 %v1808, %v1807
    %v1863 = vpack.c.b16 %v1810, %v1809
    %v1864 = vpack.c.b16 %v1812, %v1811
    %v1865 = vpack.c.b16 %v1814, %v1813
    %v1866 = vpack.c.b16 %v1816, %v1815
    %v1867 = vpack.c.b16 %v1818, %v1817
    %v1868 = vpack.c.b16 %v1820, %v1819
    %v1869 = vpack.c.b16 %v1822, %v1821
    %v1870 = vpack.c.b16 %v1824, %v1823
    %v1871 = vpack.c.b16 %v1826, %v1825
    %v1872 = vpack.c.b16 %v1828, %v1827
    %v1873 = vpack.c.b16 %v1830, %v1829
    %v1874 = vpack.c.b16 %v1832, %v1831
    %v1875 = vpack.c.b16 %v1834, %v1833
    %v1876 = vpack.c.b16 %v1836, %v1835
    %v1877 = vpack.c.b16 %v1838, %v1837
    %v1878 = vpack.c.b16 %v1840, %v1839
    %v1879 = vpack.c.b16 %v1842, %v1841
    %v1880 = vpack.c.b16 %v1844, %v1843
    %v1881 = vpack.c.b16 %v1846, %v1845
    %v1882 = vpack.c.b16 %v1848, %v1847
    %v1883 = vpack.c.b16 %v1850, %v1849
    %v1884 = vpack.c.b16 %v1852, %v1851
    %1917 = vmatpush.bf16.msra.mxu0 %v1860
    %1918 = vmatpush.bf16.msra.mxu0 %v1859
    %1919 = vmatpush.bf16.msra.mxu0 %v1858
    %1920 = vmatpush.bf16.msra.mxu0 %v1857
    %1921 = vmatpush.bf16.msra.mxu0 %v1856
    %1922 = vmatpush.bf16.msra.mxu0 %v1855
    %1923 = vmatpush.bf16.msra.mxu0 %v1854
    %1924 = vmatpush.bf16.msra.mxu0 %v1853
    %1925 = vmatmul.bf16.gmra.mxu0 %v1653
    %v1926 = vpop.f32.mrf.mxu0
    %v1927 = vadd.f32 %v1723, %v1926
    %v1928 = vpop.f32.mrf.mxu0
    %1929 = vdwg.mxu0
    %1930 = vmatpush.bf16.msra.mxu0 %v1868
    %1931 = vmatpush.bf16.msra.mxu0 %v1867
    %1932 = vmatpush.bf16.msra.mxu0 %v1866
    %1933 = vmatpush.bf16.msra.mxu0 %v1865
    %1934 = vmatpush.bf16.msra.mxu0 %v1864
    %1935 = vmatpush.bf16.msra.mxu0 %v1863
    %1936 = vmatpush.bf16.msra.mxu0 %v1862
    %1937 = vmatpush.bf16.msra.mxu0 %v1861
    %1938 = vmatmul.bf16.gmra.mxu0 %v1654
    %v1939 = vpop.f32.mrf.mxu0
    %v1940 = vadd.f32 %v1927, %v1939
    %v1941 = vpop.f32.mrf.mxu0
    %1942 = vdwg.mxu0
    %1943 = vmatpush.bf16.msra.mxu0 %v1876
    %1944 = vmatpush.bf16.msra.mxu0 %v1875
    %1945 = vmatpush.bf16.msra.mxu0 %v1874
    %1946 = vmatpush.bf16.msra.mxu0 %v1873
    %1947 = vmatpush.bf16.msra.mxu0 %v1872
    %1948 = vmatpush.bf16.msra.mxu0 %v1871
    %1949 = vmatpush.bf16.msra.mxu0 %v1870
    %1950 = vmatpush.bf16.msra.mxu0 %v1869
    %1951 = vmatmul.bf16.gmra.mxu0 %v1655
    %v1952 = vpop.f32.mrf.mxu0
    %v1953 = vadd.f32 %v1940, %v1952
    %v1954 = vpop.f32.mrf.mxu0
    %1955 = vdwg.mxu0
    %1956 = vmatpush.bf16.msra.mxu0 %v1884
    %1957 = vmatpush.bf16.msra.mxu0 %v1883
    %1958 = vmatpush.bf16.msra.mxu0 %v1882
    %1959 = vmatpush.bf16.msra.mxu0 %v1881
    %1960 = vmatpush.bf16.msra.mxu0 %v1880
    %1961 = vmatpush.bf16.msra.mxu0 %v1879
    %1962 = vmatpush.bf16.msra.mxu0 %v1878
    %1963 = vmatpush.bf16.msra.mxu0 %v1877
    %1964 = vmatmul.bf16.gmra.mxu0 %v1656
    %v1965 = vpop.f32.mrf.mxu0
    %v1966 = vadd.f32 %v1953, %v1965
    %v1967 = vpop.f32.mrf.mxu0
    %1968 = vdwg.mxu0
    %v1969 = vpack.c.bf16 %v1966, %v1966
    %1970 = vst [vmem:[#allocation10] sm:$0xf] %v1969
    // Predicated region
    $region38: #{tpu_custom_call.1} parent=1 // pred_check
      _
    $region39: #{tpu_custom_call.1} parent=1 // pred_check_branch
      %1972 = sbr.rel (0) target = $region41
    $region40: #{tpu_custom_call.1} parent=1 // pred_region
      %1974 = vsyncadd [#allocation4], 0
      %s1976 = sshll.u32 [#allocation10], 4
      %s1977 = int_to_ptr.vmem [resolvable:$true] %s1976
      %s1978 = sshll.u32 %s5, 4
      %s1979 = int_to_ptr.hbm [resolvable:$true] %s1978
      %1981 = dma.vmem_to_hbm [thread:$0]  %s1977, 64, %s1979, [#allocation4]
    $region41: #{tpu_custom_call.1} parent=1 // pred_fallthru
      _
    // Predicated region
    $region42: #{tpu_custom_call.1} parent=1 // pred_check
      _
    $region43: #{tpu_custom_call.1} parent=1 // pred_check_branch
      %1983 = sbr.rel (0) target = $region45
    $region44: #{tpu_custom_call.1} parent=1 // pred_region
      %1985 = dma.done [#allocation4], 64
    $region45: #{tpu_custom_call.1} parent=1 // pred_fallthru
      _
    %1986 = vsyncpa [#allocation3], 1
    %1987 = vsyncpa [#allocation6], 1
    %1988 = vsyncpa [#allocation9], 1
    %1989 = vsyncpa [#allocation4], 1

</llo_original>
